<compile_context>
chip_gen: v6e
topology: v6e:2x2x1
jax: 0.10.0
libtpu: 0.0.40
codegen_flags: <defaults>
</compile_context>

<pallas_src>
import functools
import math

import jax
import jax.numpy as jnp
from jax import lax
from jax.experimental import pallas as pl
from jax.experimental.pallas import tpu as pltpu

_LN_EPS = 1e-5                       # PyTorch nn.LayerNorm default
_GELU_C = math.sqrt(2.0 / math.pi)


def _layernorm_f32(h, gamma_ref, beta_ref):
    """LayerNorm over the last dim in f32 (v5e has no bf16 VPU/EUP)."""
    mu = jnp.mean(h, axis=-1, keepdims=True)
    hc = h - mu
    var = jnp.mean(hc * hc, axis=-1, keepdims=True)
    inv = lax.rsqrt(var + _LN_EPS)
    return hc * inv * gamma_ref[...].astype(jnp.float32) + beta_ref[...].astype(jnp.float32)


def _transformer_block_kernel(x_ref, g1_ref, b1_ref, wqkv_ref, bqkv_ref,
                              wout_ref, bout_ref, g2_ref, b2_ref,
                              wfc1_ref, bfc1_ref, wfc2_ref, bfc2_ref,
                              o_ref, qkv_ref, acc_ref, *, n_head: int):
    """One grid step == one batch element: (L, D) in, (L, D) out."""
    mxu_dt = wqkv_ref.dtype                               # bf16 by default
    x = x_ref[...].astype(jnp.float32)                    # (L, D)
    L, D = x.shape
    hd = D // n_head

    # ------------- LN1 + fused QKV projection (bf16 MXU, f32 accumulation) -------------
    h1 = _layernorm_f32(x, g1_ref, b1_ref)
    qkv = jnp.dot(h1.astype(mxu_dt), wqkv_ref[...],
                  preferred_element_type=jnp.float32)
    qkv = qkv + bqkv_ref[...].astype(jnp.float32)         # (L, 3D); Q columns pre-scaled.
    # Stage q/k/v in a bf16 VMEM scratch so per-head slices feed the MXU in bf16 and the
    # full f32 qkv value does not stay live across the head loop.
    qkv_ref[...] = qkv.astype(mxu_dt)
    acc_ref[...] = jnp.zeros_like(acc_ref)

    # ------------- per-head attention; head merge folded into W_out^T rows -------------
    # Static Python loop: n_head is small & compile-time, and head offsets are
    # non-128-aligned lane offsets (hd < 128), so a traced fori_loop index would force
    # dynamic masked lane slicing. Live ranges stay bounded because operands come from the
    # qkv scratch ref and the output accumulates into VMEM scratch.
    # TODO(synk): at production L (>=512), tile the kv axis with an online-softmax
    # (flash-style) m/l accumulator instead of materializing the full (L, L) scores.
    for h in range(n_head):
        c0 = h * hd
        q_h = qkv_ref[:, c0:c0 + hd]                      # (L, hd) bf16, static lane slices
        k_h = qkv_ref[:, D + c0:D + c0 + hd]
        v_h = qkv_ref[:, 2 * D + c0:2 * D + c0 + hd]
        # scores = q @ k^T without materializing a transpose; f32 accumulation.
        s = lax.dot_general(q_h, k_h, (((1,), (1,)), ((), ())),
                            preferred_element_type=jnp.float32)        # (L, L)
        s = s - jnp.max(s, axis=-1, keepdims=True)
        p = jnp.exp(s)
        p = p * pl.reciprocal(jnp.sum(p, axis=-1, keepdims=True), approx=True)
        o_h = jnp.dot(p.astype(mxu_dt), v_h, preferred_element_type=jnp.float32)
        # Head h only touches rows [c0, c0+hd) of W_out^T -> no concat / transpose merge.
        acc_ref[...] += jnp.dot(o_h.astype(mxu_dt), wout_ref[c0:c0 + hd, :],
                                preferred_element_type=jnp.float32)

    x = x + acc_ref[...] + bout_ref[...].astype(jnp.float32)           # residual 1

    # ---------------- LN2 + MLP (Linear -> GELU -> Linear) ----------------
    h2 = _layernorm_f32(x, g2_ref, b2_ref)
    m = jnp.dot(h2.astype(mxu_dt), wfc1_ref[...],
                preferred_element_type=jnp.float32) + bfc1_ref[...].astype(jnp.float32)
    # TODO(synk): PyTorch nn.GELU() defaults to the exact erf formulation; the tanh
    # approximation is used here for robust TPU (EUP) lowering (max diff ~1e-3).
    m2 = m * m
    g = m * (0.5 + 0.5 * jnp.tanh(_GELU_C * m * (1.0 + 0.044715 * m2)))
    mlp_out = jnp.dot(g.astype(mxu_dt), wfc2_ref[...],
                      preferred_element_type=jnp.float32) + bfc2_ref[...].astype(jnp.float32)

    o_ref[...] = (x + mlp_out).astype(o_ref.dtype)                     # residual 2


def _vmem_limit_bytes(L, D, M, compute_dtype):
    """Rough per-step VMEM budget: resident weights + double-buffered I/O + scratch + temps."""
    wb = jnp.dtype(compute_dtype).itemsize
    weights = wb * (D * 3 * D + D * D + D * M + M * D)
    vectors = 4 * (3 * D + 6 * D + M)                       # f32 biases + LN params
    io = 2 * 2 * 4 * L * D                                  # x/out blocks, double-buffered f32
    scratch = wb * L * 3 * D + 4 * L * D
    temps = 4 * (4 * L * D + L * 3 * D + 2 * L * L + 3 * L * M)
    est = weights + vectors + io + scratch + temps
    return int(min(max(4 * est, 32 << 20), 64 << 20))


def transformer_block(x, params, n_head, *, compute_dtype=jnp.bfloat16):
    """x: (B, L, D). params use PyTorch conventions: Linear W=(out,in), b=(out,),
    LayerNorm gamma/beta=(D,). compute_dtype = MXU operand dtype (weights stored in it);
    all accumulation and LayerNorm/softmax math stays f32."""
    B, L, D = x.shape
    M = params['w_fc1'].shape[0]
    hd = D // n_head
    scale = 1.0 / math.sqrt(hd)
    f32 = jnp.float32

    # Present weights as (in, out) so the hot path is `x @ W + b` on the MXU, fold the
    # attention scale into the Q columns of W_qkv / b_qkv at trace time, and store the
    # four projection weights in the MXU compute dtype (bf16 by default).
    col_scale = jnp.concatenate([jnp.full((D,), scale, f32), jnp.ones((2 * D,), f32)])
    wqkv_t = (params['w_qkv'].T.astype(f32) * col_scale[None, :]).astype(compute_dtype)
    bqkv = (params['b_qkv'].astype(f32) * col_scale).reshape(1, 3 * D)
    wout_t = params['w_out'].T.astype(compute_dtype)             # (D, D)
    bout = params['b_out'].astype(f32).reshape(1, D)
    wfc1_t = params['w_fc1'].T.astype(compute_dtype)             # (D, M)
    bfc1 = params['b_fc1'].astype(f32).reshape(1, M)
    wfc2_t = params['w_fc2'].T.astype(compute_dtype)             # (M, D)
    bfc2 = params['b_fc2'].astype(f32).reshape(1, D)
    g1 = params['ln1_g'].astype(f32).reshape(1, D)
    b1 = params['ln1_b'].astype(f32).reshape(1, D)
    g2 = params['ln2_g'].astype(f32).reshape(1, D)
    b2 = params['ln2_b'].astype(f32).reshape(1, D)

    resident = lambda b: (0, 0)        # constant block index -> fetched once, stays in VMEM
    kernel = functools.partial(_transformer_block_kernel, n_head=n_head)

    grid_spec = pltpu.PrefetchScalarGridSpec(
        num_scalar_prefetch=0,
        grid=(B,),                                              # one sequence per grid step
        in_specs=[
            pl.BlockSpec((None, L, D), lambda b: (b, 0, 0)),    # x: (L, D) per step
            pl.BlockSpec((1, D), resident),                     # ln1 gamma
            pl.BlockSpec((1, D), resident),                     # ln1 beta
            pl.BlockSpec((D, 3 * D), resident),                 # W_qkv^T (Q cols pre-scaled)
            pl.BlockSpec((1, 3 * D), resident),                 # b_qkv
            pl.BlockSpec((D, D), resident),                     # W_out^T
            pl.BlockSpec((1, D), resident),                     # b_out
            pl.BlockSpec((1, D), resident),                     # ln2 gamma
            pl.BlockSpec((1, D), resident),                     # ln2 beta
            pl.BlockSpec((D, M), resident),                     # W_fc1^T
            pl.BlockSpec((1, M), resident),                     # b_fc1
            pl.BlockSpec((M, D), resident),                     # W_fc2^T
            pl.BlockSpec((1, D), resident),                     # b_fc2
        ],
        out_specs=pl.BlockSpec((None, L, D), lambda b: (b, 0, 0)),
        scratch_shapes=[
            pltpu.VMEM((L, 3 * D), compute_dtype),              # bf16-staged fused qkv
            pltpu.VMEM((L, D), jnp.float32),                    # attention-output accumulator
        ],
    )

    return pl.pallas_call(
        kernel,
        out_shape=jax.ShapeDtypeStruct((B, L, D), x.dtype),
        grid_spec=grid_spec,
        compiler_params=pltpu.CompilerParams(
            dimension_semantics=("parallel",),                  # shard batch across v7x's 2 TCs
            vmem_limit_bytes=_vmem_limit_bytes(L, D, M, compute_dtype)),
    )(x, g1, b1, wqkv_t, bqkv, wout_t, bout, g2, b2, wfc1_t, bfc1, wfc2_t, bfc2)


def transformer_block_ref(x, params, n_head):
    """Pure-JAX reference mirroring the PyTorch forward (tanh-GELU in both paths)."""
    def ln(h, g, b):
        mu = h.mean(-1, keepdims=True)
        var = ((h - mu) ** 2).mean(-1, keepdims=True)
        return (h - mu) / jnp.sqrt(var + _LN_EPS) * g + b

    def gelu_tanh(m):
        return 0.5 * m * (1.0 + jnp.tanh(_GELU_C * (m + 0.044715 * m ** 3)))

    B, L, D = x.shape
    hd = D // n_head
    h = ln(x, params['ln1_g'], params['ln1_b'])
    qkv = h @ params['w_qkv'].T + params['b_qkv']
    q, k, v = jnp.split(qkv, 3, axis=-1)

    def heads(t):
        return jnp.transpose(t.reshape(B, L, n_head, hd), (0, 2, 1, 3))

    q, k, v = heads(q), heads(k), heads(v)
    s = jnp.einsum('bhqd,bhkd->bhqk', q, k) / math.sqrt(hd)
    p = jax.nn.softmax(s, axis=-1)
    o = jnp.einsum('bhqk,bhkd->bhqd', p, v)
    o = jnp.transpose(o, (0, 2, 1, 3)).reshape(B, L, D)
    x = x + o @ params['w_out'].T + params['b_out']
    h = ln(x, params['ln2_g'], params['ln2_b'])
    m = gelu_tanh(h @ params['w_fc1'].T + params['b_fc1'])
    return x + m @ params['w_fc2'].T + params['b_fc2']


if __name__ == "__main__":
    # Small shapes consistent with the module: B=2, L=8, D=32, H=4, mlp=4*D=128.
    B, L, D, H, M = 2, 8, 32, 4, 128
    key = jax.random.PRNGKey(0)
    ks = jax.random.split(key, 12)

    x = jax.random.normal(ks[0], (B, L, D), dtype=jnp.float32)
    params = dict(
        ln1_g=1.0 + 0.1 * jax.random.normal(ks[1], (D,), jnp.float32),
        ln1_b=0.05 * jax.random.normal(ks[2], (D,), jnp.float32),
        w_qkv=0.05 * jax.random.normal(ks[3], (3 * D, D), jnp.float32),
        b_qkv=0.01 * jax.random.normal(ks[4], (3 * D,), jnp.float32),
        w_out=0.05 * jax.random.normal(ks[5], (D, D), jnp.float32),
        b_out=0.01 * jax.random.normal(ks[6], (D,), jnp.float32),
        ln2_g=1.0 + 0.1 * jax.random.normal(ks[7], (D,), jnp.float32),
        ln2_b=0.05 * jax.random.normal(ks[8], (D,), jnp.float32),
        w_fc1=0.05 * jax.random.normal(ks[9], (M, D), jnp.float32),
        b_fc1=0.01 * jax.random.normal(ks[10], (M,), jnp.float32),
        w_fc2=0.05 * jax.random.normal(ks[11], (D, M), jnp.float32),
        b_fc2=jnp.zeros((D,), jnp.float32),
    )

    ref = transformer_block_ref(x, params, H)

    # Default perf path: bf16 weights / bf16 MXU operands, f32 accumulation.
    out_bf16 = jax.block_until_ready(transformer_block(x, params, H))
    assert out_bf16.shape == (B, L, D)
    err_bf16 = float(jnp.max(jnp.abs(out_bf16.astype(jnp.float32) - ref)))
    assert err_bf16 < 2.5e-2, f"bf16 path mismatch vs reference (max abs err {err_bf16})"

    # Full-precision path for tight numerical parity with the f32 reference.
    out_f32 = jax.block_until_ready(transformer_block(x, params, H, compute_dtype=jnp.float32))
    err_f32 = float(jnp.max(jnp.abs(out_f32 - ref)))
    assert err_f32 < 2e-3, f"f32 path mismatch vs reference (max abs err {err_f32})"

    print("KERNEL_OK")
</pallas_src>

<mosaic_0001>
module attributes {stable_mosaic.version = 11 : i64} {
  func.func @_transformer_block_kernel(%arg0: i32, %arg1: memref<1x8x32xf32, #tpu.memory_space<vmem>>, %arg2: memref<1x32xf32, #tpu.memory_space<vmem>>, %arg3: memref<1x32xf32, #tpu.memory_space<vmem>>, %arg4: memref<32x96xbf16, #tpu.memory_space<vmem>>, %arg5: memref<1x96xf32, #tpu.memory_space<vmem>>, %arg6: memref<32x32xbf16, #tpu.memory_space<vmem>>, %arg7: memref<1x32xf32, #tpu.memory_space<vmem>>, %arg8: memref<1x32xf32, #tpu.memory_space<vmem>>, %arg9: memref<1x32xf32, #tpu.memory_space<vmem>>, %arg10: memref<32x128xbf16, #tpu.memory_space<vmem>>, %arg11: memref<1x128xf32, #tpu.memory_space<vmem>>, %arg12: memref<128x32xbf16, #tpu.memory_space<vmem>>, %arg13: memref<1x32xf32, #tpu.memory_space<vmem>>, %arg14: memref<1x8x32xf32, #tpu.memory_space<vmem>>, %arg15: memref<8x96xbf16, #tpu.memory_space<vmem>>, %arg16: memref<8x32xf32, #tpu.memory_space<vmem>>) attributes {dimension_semantics = [#tpu.dimension_semantics<parallel>], iteration_bounds = array<i64: 2>, scalar_prefetch = 0 : i64, scratch_operands = 2 : i64, tpu.core_type = #tpu.core_type<tc>, window_params = [{transform_indices = @transform_0, window_bounds = array<i64: 1, 8, 32>}, {pipeline_mode = #tpu.pipeline_mode<synchronous>, transform_indices = @transform_1, window_bounds = array<i64: 1, 32>}, {pipeline_mode = #tpu.pipeline_mode<synchronous>, transform_indices = @transform_2, window_bounds = array<i64: 1, 32>}, {pipeline_mode = #tpu.pipeline_mode<synchronous>, transform_indices = @transform_3, window_bounds = array<i64: 32, 96>}, {pipeline_mode = #tpu.pipeline_mode<synchronous>, transform_indices = @transform_4, window_bounds = array<i64: 1, 96>}, {pipeline_mode = #tpu.pipeline_mode<synchronous>, transform_indices = @transform_5, window_bounds = array<i64: 32, 32>}, {pipeline_mode = #tpu.pipeline_mode<synchronous>, transform_indices = @transform_6, window_bounds = array<i64: 1, 32>}, {pipeline_mode = #tpu.pipeline_mode<synchronous>, transform_indices = @transform_7, window_bounds = array<i64: 1, 32>}, {pipeline_mode = #tpu.pipeline_mode<synchronous>, transform_indices = @transform_8, window_bounds = array<i64: 1, 32>}, {pipeline_mode = #tpu.pipeline_mode<synchronous>, transform_indices = @transform_9, window_bounds = array<i64: 32, 128>}, {pipeline_mode = #tpu.pipeline_mode<synchronous>, transform_indices = @transform_10, window_bounds = array<i64: 1, 128>}, {pipeline_mode = #tpu.pipeline_mode<synchronous>, transform_indices = @transform_11, window_bounds = array<i64: 128, 32>}, {pipeline_mode = #tpu.pipeline_mode<synchronous>, transform_indices = @transform_12, window_bounds = array<i64: 1, 32>}, {transform_indices = @transform_13, window_bounds = array<i64: 1, 8, 32>}]} {
    %c0 = arith.constant 0 : index
    %c0_0 = arith.constant 0 : index
    %c0_1 = arith.constant 0 : index
    %0 = vector.load %arg1[%c0, %c0_0, %c0_1] : memref<1x8x32xf32, #tpu.memory_space<vmem>>, vector<1x8x32xf32>
    %1 = vector.shape_cast %0 : vector<1x8x32xf32> to vector<8x32xf32>
    %cst = arith.constant dense<0.000000e+00> : vector<8xf32>
    %2 = vector.multi_reduction <add>, %1, %cst [1] : vector<8x32xf32> to vector<8xf32>
    %3 = vector.shape_cast %2 : vector<8xf32> to vector<8x1xf32>
    %cst_2 = arith.constant 3.200000e+01 : f32
    %4 = vector.broadcast %cst_2 : f32 to vector<8x1xf32>
    %5 = arith.divf %3, %4 : vector<8x1xf32>
    %6 = vector.broadcast %5 : vector<8x1xf32> to vector<8x32xf32>
    %7 = arith.subf %1, %6 : vector<8x32xf32>
    %8 = arith.mulf %7, %7 : vector<8x32xf32>
    %cst_3 = arith.constant dense<0.000000e+00> : vector<8xf32>
    %9 = vector.multi_reduction <add>, %8, %cst_3 [1] : vector<8x32xf32> to vector<8xf32>
    %10 = vector.shape_cast %9 : vector<8xf32> to vector<8x1xf32>
    %cst_4 = arith.constant 3.200000e+01 : f32
    %11 = vector.broadcast %cst_4 : f32 to vector<8x1xf32>
    %12 = arith.divf %10, %11 : vector<8x1xf32>
    %cst_5 = arith.constant 9.99999974E-6 : f32
    %13 = vector.broadcast %cst_5 : f32 to vector<8x1xf32>
    %14 = arith.addf %12, %13 : vector<8x1xf32>
    %15 = math.rsqrt %14 : vector<8x1xf32>
    %16 = vector.broadcast %15 : vector<8x1xf32> to vector<8x32xf32>
    %17 = arith.mulf %7, %16 : vector<8x32xf32>
    %c0_6 = arith.constant 0 : index
    %c0_7 = arith.constant 0 : index
    %18 = vector.load %arg2[%c0_6, %c0_7] : memref<1x32xf32, #tpu.memory_space<vmem>>, vector<1x32xf32>
    %19 = vector.broadcast %18 : vector<1x32xf32> to vector<8x32xf32>
    %20 = arith.mulf %17, %19 : vector<8x32xf32>
    %c0_8 = arith.constant 0 : index
    %c0_9 = arith.constant 0 : index
    %21 = vector.load %arg3[%c0_8, %c0_9] : memref<1x32xf32, #tpu.memory_space<vmem>>, vector<1x32xf32>
    %22 = vector.broadcast %21 : vector<1x32xf32> to vector<8x32xf32>
    %23 = arith.addf %20, %22 : vector<8x32xf32>
    %24 = arith.truncf %23 : vector<8x32xf32> to vector<8x32xbf16>
    %c0_10 = arith.constant 0 : index
    %c0_11 = arith.constant 0 : index
    %25 = vector.load %arg4[%c0_10, %c0_11] : memref<32x96xbf16, #tpu.memory_space<vmem>>, vector<32x96xbf16>
    %cst_12 = arith.constant dense<0.000000e+00> : vector<8x96xf32>
    %26 = tpu.matmul %24, %25, %cst_12 {dimension_numbers = #tpu.dot_dimension_numbers<[1], [0], [0], [1], [0, 0, 1, 1], [], []>} : vector<8x32xbf16>, vector<32x96xbf16>, vector<8x96xf32> -> vector<8x96xf32>
    %c0_13 = arith.constant 0 : index
    %c0_14 = arith.constant 0 : index
    %27 = vector.load %arg5[%c0_13, %c0_14] : memref<1x96xf32, #tpu.memory_space<vmem>>, vector<1x96xf32>
    %28 = vector.broadcast %27 : vector<1x96xf32> to vector<8x96xf32>
    %29 = arith.addf %26, %28 : vector<8x96xf32>
    %30 = arith.truncf %29 : vector<8x96xf32> to vector<8x96xbf16>
    %c0_15 = arith.constant 0 : index
    %c0_16 = arith.constant 0 : index
    %31 = vector.load %arg15[%c0_15, %c0_16] : memref<8x96xbf16, #tpu.memory_space<vmem>>, vector<8x96xbf16>
    tpu.vector_store %arg15[%c0_15, %c0_16], %30 {strides = array<i32>} : memref<8x96xbf16, #tpu.memory_space<vmem>>, vector<8x96xbf16>,
    %cst_17 = arith.constant 0.000000e+00 : f32
    %32 = vector.broadcast %cst_17 : f32 to vector<8x32xf32>
    %c0_18 = arith.constant 0 : index
    %c0_19 = arith.constant 0 : index
    %33 = vector.load %arg16[%c0_18, %c0_19] : memref<8x32xf32, #tpu.memory_space<vmem>>, vector<8x32xf32>
    tpu.vector_store %arg16[%c0_18, %c0_19], %32 {strides = array<i32>} : memref<8x32xf32, #tpu.memory_space<vmem>>, vector<8x32xf32>,
    %c0_20 = arith.constant 0 : index
    %c0_21 = arith.constant 0 : index
    %34 = vector.load %arg15[%c0_20, %c0_21] : memref<8x96xbf16, #tpu.memory_space<vmem>>, vector<8x8xbf16>
    %c0_22 = arith.constant 0 : index
    %c32 = arith.constant 32 : index
    %35 = vector.load %arg15[%c0_22, %c32] : memref<8x96xbf16, #tpu.memory_space<vmem>>, vector<8x8xbf16>
    %c0_23 = arith.constant 0 : index
    %c64 = arith.constant 64 : index
    %36 = vector.load %arg15[%c0_23, %c64] : memref<8x96xbf16, #tpu.memory_space<vmem>>, vector<8x8xbf16>
    %cst_24 = arith.constant dense<0.000000e+00> : vector<8x8xf32>
    %37 = tpu.matmul %34, %35, %cst_24 {dimension_numbers = #tpu.dot_dimension_numbers<[1], [1], [0], [0], [0, 0, 1, 0], [], []>} : vector<8x8xbf16>, vector<8x8xbf16>, vector<8x8xf32> -> vector<8x8xf32>
    %cst_25 = arith.constant dense<0xFF800000> : vector<8xf32>
    %38 = vector.multi_reduction <maximumf>, %37, %cst_25 [1] : vector<8x8xf32> to vector<8xf32>
    %39 = vector.shape_cast %38 : vector<8xf32> to vector<8x1xf32>
    %40 = vector.broadcast %39 : vector<8x1xf32> to vector<8x8xf32>
    %41 = arith.subf %37, %40 : vector<8x8xf32>
    %42 = math.exp %41 : vector<8x8xf32>
    %cst_26 = arith.constant dense<0.000000e+00> : vector<8xf32>
    %43 = vector.multi_reduction <add>, %42, %cst_26 [1] : vector<8x8xf32> to vector<8xf32>
    %44 = vector.shape_cast %43 : vector<8xf32> to vector<8x1xf32>
    %45 = tpu.reciprocal %44 {approx = true} : vector<8x1xf32> -> vector<8x1xf32>
    %46 = vector.broadcast %45 : vector<8x1xf32> to vector<8x8xf32>
    %47 = arith.mulf %42, %46 : vector<8x8xf32>
    %48 = arith.truncf %47 : vector<8x8xf32> to vector<8x8xbf16>
    %cst_27 = arith.constant dense<0.000000e+00> : vector<8x8xf32>
    %49 = tpu.matmul %48, %36, %cst_27 {dimension_numbers = #tpu.dot_dimension_numbers<[1], [0], [0], [1], [0, 0, 1, 1], [], []>} : vector<8x8xbf16>, vector<8x8xbf16>, vector<8x8xf32> -> vector<8x8xf32>
    %c0_28 = arith.constant 0 : index
    %c0_29 = arith.constant 0 : index
    %50 = vector.load %arg16[%c0_28, %c0_29] : memref<8x32xf32, #tpu.memory_space<vmem>>, vector<8x32xf32>
    %51 = arith.truncf %49 : vector<8x8xf32> to vector<8x8xbf16>
    %c0_30 = arith.constant 0 : index
    %c0_31 = arith.constant 0 : index
    %52 = vector.load %arg6[%c0_30, %c0_31] : memref<32x32xbf16, #tpu.memory_space<vmem>>, vector<8x32xbf16>
    %cst_32 = arith.constant dense<0.000000e+00> : vector<8x32xf32>
    %53 = tpu.matmul %51, %52, %cst_32 {dimension_numbers = #tpu.dot_dimension_numbers<[1], [0], [0], [1], [0, 0, 1, 1], [], []>} : vector<8x8xbf16>, vector<8x32xbf16>, vector<8x32xf32> -> vector<8x32xf32>
    %54 = arith.addf %50, %53 : vector<8x32xf32>
    %c0_33 = arith.constant 0 : index
    %c0_34 = arith.constant 0 : index
    %55 = vector.load %arg16[%c0_33, %c0_34] : memref<8x32xf32, #tpu.memory_space<vmem>>, vector<8x32xf32>
    tpu.vector_store %arg16[%c0_33, %c0_34], %54 {strides = array<i32>} : memref<8x32xf32, #tpu.memory_space<vmem>>, vector<8x32xf32>,
    %c0_35 = arith.constant 0 : index
    %c8 = arith.constant 8 : index
    %56 = vector.load %arg15[%c0_35, %c8] : memref<8x96xbf16, #tpu.memory_space<vmem>>, vector<8x8xbf16>
    %c0_36 = arith.constant 0 : index
    %c40 = arith.constant 40 : index
    %57 = vector.load %arg15[%c0_36, %c40] : memref<8x96xbf16, #tpu.memory_space<vmem>>, vector<8x8xbf16>
    %c0_37 = arith.constant 0 : index
    %c72 = arith.constant 72 : index
    %58 = vector.load %arg15[%c0_37, %c72] : memref<8x96xbf16, #tpu.memory_space<vmem>>, vector<8x8xbf16>
    %cst_38 = arith.constant dense<0.000000e+00> : vector<8x8xf32>
    %59 = tpu.matmul %56, %57, %cst_38 {dimension_numbers = #tpu.dot_dimension_numbers<[1], [1], [0], [0], [0, 0, 1, 0], [], []>} : vector<8x8xbf16>, vector<8x8xbf16>, vector<8x8xf32> -> vector<8x8xf32>
    %cst_39 = arith.constant dense<0xFF800000> : vector<8xf32>
    %60 = vector.multi_reduction <maximumf>, %59, %cst_39 [1] : vector<8x8xf32> to vector<8xf32>
    %61 = vector.shape_cast %60 : vector<8xf32> to vector<8x1xf32>
    %62 = vector.broadcast %61 : vector<8x1xf32> to vector<8x8xf32>
    %63 = arith.subf %59, %62 : vector<8x8xf32>
    %64 = math.exp %63 : vector<8x8xf32>
    %cst_40 = arith.constant dense<0.000000e+00> : vector<8xf32>
    %65 = vector.multi_reduction <add>, %64, %cst_40 [1] : vector<8x8xf32> to vector<8xf32>
    %66 = vector.shape_cast %65 : vector<8xf32> to vector<8x1xf32>
    %67 = tpu.reciprocal %66 {approx = true} : vector<8x1xf32> -> vector<8x1xf32>
    %68 = vector.broadcast %67 : vector<8x1xf32> to vector<8x8xf32>
    %69 = arith.mulf %64, %68 : vector<8x8xf32>
    %70 = arith.truncf %69 : vector<8x8xf32> to vector<8x8xbf16>
    %cst_41 = arith.constant dense<0.000000e+00> : vector<8x8xf32>
    %71 = tpu.matmul %70, %58, %cst_41 {dimension_numbers = #tpu.dot_dimension_numbers<[1], [0], [0], [1], [0, 0, 1, 1], [], []>} : vector<8x8xbf16>, vector<8x8xbf16>, vector<8x8xf32> -> vector<8x8xf32>
    %c0_42 = arith.constant 0 : index
    %c0_43 = arith.constant 0 : index
    %72 = vector.load %arg16[%c0_42, %c0_43] : memref<8x32xf32, #tpu.memory_space<vmem>>, vector<8x32xf32>
    %73 = arith.truncf %71 : vector<8x8xf32> to vector<8x8xbf16>
    %c8_44 = arith.constant 8 : index
    %c0_45 = arith.constant 0 : index
    %74 = vector.load %arg6[%c8_44, %c0_45] : memref<32x32xbf16, #tpu.memory_space<vmem>>, vector<8x32xbf16>
    %cst_46 = arith.constant dense<0.000000e+00> : vector<8x32xf32>
    %75 = tpu.matmul %73, %74, %cst_46 {dimension_numbers = #tpu.dot_dimension_numbers<[1], [0], [0], [1], [0, 0, 1, 1], [], []>} : vector<8x8xbf16>, vector<8x32xbf16>, vector<8x32xf32> -> vector<8x32xf32>
    %76 = arith.addf %72, %75 : vector<8x32xf32>
    %c0_47 = arith.constant 0 : index
    %c0_48 = arith.constant 0 : index
    %77 = vector.load %arg16[%c0_47, %c0_48] : memref<8x32xf32, #tpu.memory_space<vmem>>, vector<8x32xf32>
    tpu.vector_store %arg16[%c0_47, %c0_48], %76 {strides = array<i32>} : memref<8x32xf32, #tpu.memory_space<vmem>>, vector<8x32xf32>,
    %c0_49 = arith.constant 0 : index
    %c16 = arith.constant 16 : index
    %78 = vector.load %arg15[%c0_49, %c16] : memref<8x96xbf16, #tpu.memory_space<vmem>>, vector<8x8xbf16>
    %c0_50 = arith.constant 0 : index
    %c48 = arith.constant 48 : index
    %79 = vector.load %arg15[%c0_50, %c48] : memref<8x96xbf16, #tpu.memory_space<vmem>>, vector<8x8xbf16>
    %c0_51 = arith.constant 0 : index
    %c80 = arith.constant 80 : index
    %80 = vector.load %arg15[%c0_51, %c80] : memref<8x96xbf16, #tpu.memory_space<vmem>>, vector<8x8xbf16>
    %cst_52 = arith.constant dense<0.000000e+00> : vector<8x8xf32>
    %81 = tpu.matmul %78, %79, %cst_52 {dimension_numbers = #tpu.dot_dimension_numbers<[1], [1], [0], [0], [0, 0, 1, 0], [], []>} : vector<8x8xbf16>, vector<8x8xbf16>, vector<8x8xf32> -> vector<8x8xf32>
    %cst_53 = arith.constant dense<0xFF800000> : vector<8xf32>
    %82 = vector.multi_reduction <maximumf>, %81, %cst_53 [1] : vector<8x8xf32> to vector<8xf32>
    %83 = vector.shape_cast %82 : vector<8xf32> to vector<8x1xf32>
    %84 = vector.broadcast %83 : vector<8x1xf32> to vector<8x8xf32>
    %85 = arith.subf %81, %84 : vector<8x8xf32>
    %86 = math.exp %85 : vector<8x8xf32>
    %cst_54 = arith.constant dense<0.000000e+00> : vector<8xf32>
    %87 = vector.multi_reduction <add>, %86, %cst_54 [1] : vector<8x8xf32> to vector<8xf32>
    %88 = vector.shape_cast %87 : vector<8xf32> to vector<8x1xf32>
    %89 = tpu.reciprocal %88 {approx = true} : vector<8x1xf32> -> vector<8x1xf32>
    %90 = vector.broadcast %89 : vector<8x1xf32> to vector<8x8xf32>
    %91 = arith.mulf %86, %90 : vector<8x8xf32>
    %92 = arith.truncf %91 : vector<8x8xf32> to vector<8x8xbf16>
    %cst_55 = arith.constant dense<0.000000e+00> : vector<8x8xf32>
    %93 = tpu.matmul %92, %80, %cst_55 {dimension_numbers = #tpu.dot_dimension_numbers<[1], [0], [0], [1], [0, 0, 1, 1], [], []>} : vector<8x8xbf16>, vector<8x8xbf16>, vector<8x8xf32> -> vector<8x8xf32>
    %c0_56 = arith.constant 0 : index
    %c0_57 = arith.constant 0 : index
    %94 = vector.load %arg16[%c0_56, %c0_57] : memref<8x32xf32, #tpu.memory_space<vmem>>, vector<8x32xf32>
    %95 = arith.truncf %93 : vector<8x8xf32> to vector<8x8xbf16>
    %c16_58 = arith.constant 16 : index
    %c0_59 = arith.constant 0 : index
    %96 = vector.load %arg6[%c16_58, %c0_59] : memref<32x32xbf16, #tpu.memory_space<vmem>>, vector<8x32xbf16>
    %cst_60 = arith.constant dense<0.000000e+00> : vector<8x32xf32>
    %97 = tpu.matmul %95, %96, %cst_60 {dimension_numbers = #tpu.dot_dimension_numbers<[1], [0], [0], [1], [0, 0, 1, 1], [], []>} : vector<8x8xbf16>, vector<8x32xbf16>, vector<8x32xf32> -> vector<8x32xf32>
    %98 = arith.addf %94, %97 : vector<8x32xf32>
    %c0_61 = arith.constant 0 : index
    %c0_62 = arith.constant 0 : index
    %99 = vector.load %arg16[%c0_61, %c0_62] : memref<8x32xf32, #tpu.memory_space<vmem>>, vector<8x32xf32>
    tpu.vector_store %arg16[%c0_61, %c0_62], %98 {strides = array<i32>} : memref<8x32xf32, #tpu.memory_space<vmem>>, vector<8x32xf32>,
    %c0_63 = arith.constant 0 : index
    %c24 = arith.constant 24 : index
    %100 = vector.load %arg15[%c0_63, %c24] : memref<8x96xbf16, #tpu.memory_space<vmem>>, vector<8x8xbf16>
    %c0_64 = arith.constant 0 : index
    %c56 = arith.constant 56 : index
    %101 = vector.load %arg15[%c0_64, %c56] : memref<8x96xbf16, #tpu.memory_space<vmem>>, vector<8x8xbf16>
    %c0_65 = arith.constant 0 : index
    %c88 = arith.constant 88 : index
    %102 = vector.load %arg15[%c0_65, %c88] : memref<8x96xbf16, #tpu.memory_space<vmem>>, vector<8x8xbf16>
    %cst_66 = arith.constant dense<0.000000e+00> : vector<8x8xf32>
    %103 = tpu.matmul %100, %101, %cst_66 {dimension_numbers = #tpu.dot_dimension_numbers<[1], [1], [0], [0], [0, 0, 1, 0], [], []>} : vector<8x8xbf16>, vector<8x8xbf16>, vector<8x8xf32> -> vector<8x8xf32>
    %cst_67 = arith.constant dense<0xFF800000> : vector<8xf32>
    %104 = vector.multi_reduction <maximumf>, %103, %cst_67 [1] : vector<8x8xf32> to vector<8xf32>
    %105 = vector.shape_cast %104 : vector<8xf32> to vector<8x1xf32>
    %106 = vector.broadcast %105 : vector<8x1xf32> to vector<8x8xf32>
    %107 = arith.subf %103, %106 : vector<8x8xf32>
    %108 = math.exp %107 : vector<8x8xf32>
    %cst_68 = arith.constant dense<0.000000e+00> : vector<8xf32>
    %109 = vector.multi_reduction <add>, %108, %cst_68 [1] : vector<8x8xf32> to vector<8xf32>
    %110 = vector.shape_cast %109 : vector<8xf32> to vector<8x1xf32>
    %111 = tpu.reciprocal %110 {approx = true} : vector<8x1xf32> -> vector<8x1xf32>
    %112 = vector.broadcast %111 : vector<8x1xf32> to vector<8x8xf32>
    %113 = arith.mulf %108, %112 : vector<8x8xf32>
    %114 = arith.truncf %113 : vector<8x8xf32> to vector<8x8xbf16>
    %cst_69 = arith.constant dense<0.000000e+00> : vector<8x8xf32>
    %115 = tpu.matmul %114, %102, %cst_69 {dimension_numbers = #tpu.dot_dimension_numbers<[1], [0], [0], [1], [0, 0, 1, 1], [], []>} : vector<8x8xbf16>, vector<8x8xbf16>, vector<8x8xf32> -> vector<8x8xf32>
    %c0_70 = arith.constant 0 : index
    %c0_71 = arith.constant 0 : index
    %116 = vector.load %arg16[%c0_70, %c0_71] : memref<8x32xf32, #tpu.memory_space<vmem>>, vector<8x32xf32>
    %117 = arith.truncf %115 : vector<8x8xf32> to vector<8x8xbf16>
    %c24_72 = arith.constant 24 : index
    %c0_73 = arith.constant 0 : index
    %118 = vector.load %arg6[%c24_72, %c0_73] : memref<32x32xbf16, #tpu.memory_space<vmem>>, vector<8x32xbf16>
    %cst_74 = arith.constant dense<0.000000e+00> : vector<8x32xf32>
    %119 = tpu.matmul %117, %118, %cst_74 {dimension_numbers = #tpu.dot_dimension_numbers<[1], [0], [0], [1], [0, 0, 1, 1], [], []>} : vector<8x8xbf16>, vector<8x32xbf16>, vector<8x32xf32> -> vector<8x32xf32>
    %120 = arith.addf %116, %119 : vector<8x32xf32>
    %c0_75 = arith.constant 0 : index
    %c0_76 = arith.constant 0 : index
    %121 = vector.load %arg16[%c0_75, %c0_76] : memref<8x32xf32, #tpu.memory_space<vmem>>, vector<8x32xf32>
    tpu.vector_store %arg16[%c0_75, %c0_76], %120 {strides = array<i32>} : memref<8x32xf32, #tpu.memory_space<vmem>>, vector<8x32xf32>,
    %c0_77 = arith.constant 0 : index
    %c0_78 = arith.constant 0 : index
    %122 = vector.load %arg16[%c0_77, %c0_78] : memref<8x32xf32, #tpu.memory_space<vmem>>, vector<8x32xf32>
    %123 = arith.addf %1, %122 : vector<8x32xf32>
    %c0_79 = arith.constant 0 : index
    %c0_80 = arith.constant 0 : index
    %124 = vector.load %arg7[%c0_79, %c0_80] : memref<1x32xf32, #tpu.memory_space<vmem>>, vector<1x32xf32>
    %125 = vector.broadcast %124 : vector<1x32xf32> to vector<8x32xf32>
    %126 = arith.addf %123, %125 : vector<8x32xf32>
    %cst_81 = arith.constant dense<0.000000e+00> : vector<8xf32>
    %127 = vector.multi_reduction <add>, %126, %cst_81 [1] : vector<8x32xf32> to vector<8xf32>
    %128 = vector.shape_cast %127 : vector<8xf32> to vector<8x1xf32>
    %cst_82 = arith.constant 3.200000e+01 : f32
    %129 = vector.broadcast %cst_82 : f32 to vector<8x1xf32>
    %130 = arith.divf %128, %129 : vector<8x1xf32>
    %131 = vector.broadcast %130 : vector<8x1xf32> to vector<8x32xf32>
    %132 = arith.subf %126, %131 : vector<8x32xf32>
    %133 = arith.mulf %132, %132 : vector<8x32xf32>
    %cst_83 = arith.constant dense<0.000000e+00> : vector<8xf32>
    %134 = vector.multi_reduction <add>, %133, %cst_83 [1] : vector<8x32xf32> to vector<8xf32>
    %135 = vector.shape_cast %134 : vector<8xf32> to vector<8x1xf32>
    %cst_84 = arith.constant 3.200000e+01 : f32
    %136 = vector.broadcast %cst_84 : f32 to vector<8x1xf32>
    %137 = arith.divf %135, %136 : vector<8x1xf32>
    %cst_85 = arith.constant 9.99999974E-6 : f32
    %138 = vector.broadcast %cst_85 : f32 to vector<8x1xf32>
    %139 = arith.addf %137, %138 : vector<8x1xf32>
    %140 = math.rsqrt %139 : vector<8x1xf32>
    %141 = vector.broadcast %140 : vector<8x1xf32> to vector<8x32xf32>
    %142 = arith.mulf %132, %141 : vector<8x32xf32>
    %c0_86 = arith.constant 0 : index
    %c0_87 = arith.constant 0 : index
    %143 = vector.load %arg8[%c0_86, %c0_87] : memref<1x32xf32, #tpu.memory_space<vmem>>, vector<1x32xf32>
    %144 = vector.broadcast %143 : vector<1x32xf32> to vector<8x32xf32>
    %145 = arith.mulf %142, %144 : vector<8x32xf32>
    %c0_88 = arith.constant 0 : index
    %c0_89 = arith.constant 0 : index
    %146 = vector.load %arg9[%c0_88, %c0_89] : memref<1x32xf32, #tpu.memory_space<vmem>>, vector<1x32xf32>
    %147 = vector.broadcast %146 : vector<1x32xf32> to vector<8x32xf32>
    %148 = arith.addf %145, %147 : vector<8x32xf32>
    %149 = arith.truncf %148 : vector<8x32xf32> to vector<8x32xbf16>
    %c0_90 = arith.constant 0 : index
    %c0_91 = arith.constant 0 : index
    %150 = vector.load %arg10[%c0_90, %c0_91] : memref<32x128xbf16, #tpu.memory_space<vmem>>, vector<32x128xbf16>
    %cst_92 = arith.constant dense<0.000000e+00> : vector<8x128xf32>
    %151 = tpu.matmul %149, %150, %cst_92 {dimension_numbers = #tpu.dot_dimension_numbers<[1], [0], [0], [1], [0, 0, 1, 1], [], []>} : vector<8x32xbf16>, vector<32x128xbf16>, vector<8x128xf32> -> vector<8x128xf32>
    %c0_93 = arith.constant 0 : index
    %c0_94 = arith.constant 0 : index
    %152 = vector.load %arg11[%c0_93, %c0_94] : memref<1x128xf32, #tpu.memory_space<vmem>>, vector<1x128xf32>
    %153 = vector.broadcast %152 : vector<1x128xf32> to vector<8x128xf32>
    %154 = arith.addf %151, %153 : vector<8x128xf32>
    %155 = arith.mulf %154, %154 : vector<8x128xf32>
    %cst_95 = arith.constant 0.797884583 : f32
    %156 = vector.broadcast %cst_95 : f32 to vector<8x128xf32>
    %157 = arith.mulf %156, %154 : vector<8x128xf32>
    %cst_96 = arith.constant 4.471500e-02 : f32
    %158 = vector.broadcast %cst_96 : f32 to vector<8x128xf32>
    %159 = arith.mulf %158, %155 : vector<8x128xf32>
    %cst_97 = arith.constant 1.000000e+00 : f32
    %160 = vector.broadcast %cst_97 : f32 to vector<8x128xf32>
    %161 = arith.addf %160, %159 : vector<8x128xf32>
    %162 = arith.mulf %157, %161 : vector<8x128xf32>
    %163 = math.tanh %162 : vector<8x128xf32>
    %cst_98 = arith.constant 5.000000e-01 : f32
    %164 = vector.broadcast %cst_98 : f32 to vector<8x128xf32>
    %165 = arith.mulf %164, %163 : vector<8x128xf32>
    %cst_99 = arith.constant 5.000000e-01 : f32
    %166 = vector.broadcast %cst_99 : f32 to vector<8x128xf32>
    %167 = arith.addf %166, %165 : vector<8x128xf32>
    %168 = arith.mulf %154, %167 : vector<8x128xf32>
    %169 = arith.truncf %168 : vector<8x128xf32> to vector<8x128xbf16>
    %c0_100 = arith.constant 0 : index
    %c0_101 = arith.constant 0 : index
    %170 = vector.load %arg12[%c0_100, %c0_101] : memref<128x32xbf16, #tpu.memory_space<vmem>>, vector<128x32xbf16>
    %cst_102 = arith.constant dense<0.000000e+00> : vector<8x32xf32>
    %171 = tpu.matmul %169, %170, %cst_102 {dimension_numbers = #tpu.dot_dimension_numbers<[1], [0], [0], [1], [0, 0, 1, 1], [], []>} : vector<8x128xbf16>, vector<128x32xbf16>, vector<8x32xf32> -> vector<8x32xf32>
    %c0_103 = arith.constant 0 : index
    %c0_104 = arith.constant 0 : index
    %172 = vector.load %arg13[%c0_103, %c0_104] : memref<1x32xf32, #tpu.memory_space<vmem>>, vector<1x32xf32>
    %173 = vector.broadcast %172 : vector<1x32xf32> to vector<8x32xf32>
    %174 = arith.addf %171, %173 : vector<8x32xf32>
    %175 = arith.addf %126, %174 : vector<8x32xf32>
    %c0_105 = arith.constant 0 : index
    %c0_106 = arith.constant 0 : index
    %c0_107 = arith.constant 0 : index
    %176 = vector.load %arg14[%c0_105, %c0_106, %c0_107] : memref<1x8x32xf32, #tpu.memory_space<vmem>>, vector<1x8x32xf32>
    %177 = vector.shape_cast %176 : vector<1x8x32xf32> to vector<8x32xf32>
    %178 = vector.shape_cast %175 : vector<8x32xf32> to vector<1x8x32xf32>
    tpu.vector_store %arg14[%c0_105, %c0_106, %c0_107], %178 {strides = array<i32>} : memref<1x8x32xf32, #tpu.memory_space<vmem>>, vector<1x8x32xf32>,
    return
  }
  func.func @transform_0(%arg0: i32) -> (i32, i32, i32) {
    %c0_i32 = arith.constant 0 : i32
    %c0_i32_0 = arith.constant 0 : i32
    %c0_i32_1 = arith.constant 0 : i32
    return %arg0, %c0_i32, %c0_i32_0 : i32, i32, i32
  }
  func.func @transform_1(%arg0: i32) -> (i32, i32) {
    %c0_i32 = arith.constant 0 : i32
    %c0_i32_0 = arith.constant 0 : i32
    %c0_i32_1 = arith.constant 0 : i32
    return %c0_i32, %c0_i32_0 : i32, i32
  }
  func.func @transform_2(%arg0: i32) -> (i32, i32) {
    %c0_i32 = arith.constant 0 : i32
    %c0_i32_0 = arith.constant 0 : i32
    %c0_i32_1 = arith.constant 0 : i32
    return %c0_i32, %c0_i32_0 : i32, i32
  }
  func.func @transform_3(%arg0: i32) -> (i32, i32) {
    %c0_i32 = arith.constant 0 : i32
    %c0_i32_0 = arith.constant 0 : i32
    %c0_i32_1 = arith.constant 0 : i32
    return %c0_i32, %c0_i32_0 : i32, i32
  }
  func.func @transform_4(%arg0: i32) -> (i32, i32) {
    %c0_i32 = arith.constant 0 : i32
    %c0_i32_0 = arith.constant 0 : i32
    %c0_i32_1 = arith.constant 0 : i32
    return %c0_i32, %c0_i32_0 : i32, i32
  }
  func.func @transform_5(%arg0: i32) -> (i32, i32) {
    %c0_i32 = arith.constant 0 : i32
    %c0_i32_0 = arith.constant 0 : i32
    %c0_i32_1 = arith.constant 0 : i32
    return %c0_i32, %c0_i32_0 : i32, i32
  }
  func.func @transform_6(%arg0: i32) -> (i32, i32) {
    %c0_i32 = arith.constant 0 : i32
    %c0_i32_0 = arith.constant 0 : i32
    %c0_i32_1 = arith.constant 0 : i32
    return %c0_i32, %c0_i32_0 : i32, i32
  }
  func.func @transform_7(%arg0: i32) -> (i32, i32) {
    %c0_i32 = arith.constant 0 : i32
    %c0_i32_0 = arith.constant 0 : i32
    %c0_i32_1 = arith.constant 0 : i32
    return %c0_i32, %c0_i32_0 : i32, i32
  }
  func.func @transform_8(%arg0: i32) -> (i32, i32) {
    %c0_i32 = arith.constant 0 : i32
    %c0_i32_0 = arith.constant 0 : i32
    %c0_i32_1 = arith.constant 0 : i32
    return %c0_i32, %c0_i32_0 : i32, i32
  }
  func.func @transform_9(%arg0: i32) -> (i32, i32) {
    %c0_i32 = arith.constant 0 : i32
    %c0_i32_0 = arith.constant 0 : i32
    %c0_i32_1 = arith.constant 0 : i32
    return %c0_i32, %c0_i32_0 : i32, i32
  }
  func.func @transform_10(%arg0: i32) -> (i32, i32) {
    %c0_i32 = arith.constant 0 : i32
    %c0_i32_0 = arith.constant 0 : i32
    %c0_i32_1 = arith.constant 0 : i32
    return %c0_i32, %c0_i32_0 : i32, i32
  }
  func.func @transform_11(%arg0: i32) -> (i32, i32) {
    %c0_i32 = arith.constant 0 : i32
    %c0_i32_0 = arith.constant 0 : i32
    %c0_i32_1 = arith.constant 0 : i32
    return %c0_i32, %c0_i32_0 : i32, i32
  }
  func.func @transform_12(%arg0: i32) -> (i32, i32) {
    %c0_i32 = arith.constant 0 : i32
    %c0_i32_0 = arith.constant 0 : i32
    %c0_i32_1 = arith.constant 0 : i32
    return %c0_i32, %c0_i32_0 : i32, i32
  }
  func.func @transform_13(%arg0: i32) -> (i32, i32, i32) {
    %c0_i32 = arith.constant 0 : i32
    %c0_i32_0 = arith.constant 0 : i32
    %c0_i32_1 = arith.constant 0 : i32
    return %arg0, %c0_i32, %c0_i32_0 : i32, i32, i32
  }
}

</mosaic_0001>

<llo_original>
// kernel: tpu_custom_call.1
$region0: #{tpu_custom_call.1}
  #allocation0 [shape = 'u32[]', space=smem, size = 0x4, offset = 0x4, fixed_abs, tag = 'smem constant byte address 0x4 - core index']
  #allocation1 [shape = 'u32[144,128]{1,0:T(1,128)}', space=vmem, size = 0x12000, scoped, tag = 'internal scratch']
  #allocation2 [shape = 'bf16[8,96]{1,0:T(8,128)(2,1)}', space=vmem, size = 0x800, scoped, tag = 'scratch operand']
  #allocation3 [shape = 'f32[8,32]{1,0:T(8,128)}', space=vmem, size = 0x1000, scoped, tag = 'scratch operand']
  %s0 = inlined_call_operand.vmem [shape: f32[2,8,32], index: 0, kind: input, shape index: {}]
  %s1 = inlined_call_operand.vmem [shape: f32[1,32], index: 1, kind: input, shape index: {}]
  %s2 = inlined_call_operand.vmem [shape: f32[1,32], index: 2, kind: input, shape index: {}]
  %s3 = inlined_call_operand.vmem [shape: bf16[32,96], index: 3, kind: input, shape index: {}]
  %s4 = inlined_call_operand.vmem [shape: f32[1,96], index: 4, kind: input, shape index: {}]
  %s5 = inlined_call_operand.vmem [shape: bf16[32,32], index: 5, kind: input, shape index: {}]
  %s6 = inlined_call_operand.vmem [shape: f32[1,32], index: 6, kind: input, shape index: {}]
  %s7 = inlined_call_operand.vmem [shape: f32[1,32], index: 7, kind: input, shape index: {}]
  %s8 = inlined_call_operand.vmem [shape: f32[1,32], index: 8, kind: input, shape index: {}]
  %s9 = inlined_call_operand.vmem [shape: bf16[32,128], index: 9, kind: input, shape index: {}]
  %s10 = inlined_call_operand.vmem [shape: f32[1,128], index: 10, kind: input, shape index: {}]
  %s11 = inlined_call_operand.vmem [shape: bf16[128,32], index: 11, kind: input, shape index: {}]
  %s12 = inlined_call_operand.vmem [shape: f32[1,32], index: 12, kind: input, shape index: {}]
  %s13 = inlined_call_operand.hbm [shape: f32[2,8,32], index: 13, kind: output, shape index: {}]
  %s14 = sld [smem:[#allocation0]]
  $region85: #{tpu_custom_call.1} parent=0
    _
  %s16 = ssub.s32 1, %s14
  %s17 = scalar_select 0, %s16, %s14
  $region1: #{tpu_custom_call.1} parent=0
    #allocation4 [shape = 'u8[8192]{0}', space=vmem, size = 0x2000, scoped, tag = 'output window, operand 0']
    #allocation5 [shape = 's32[2]{0}', space=sflag, size = 0x8, scoped, tag = 'scoped memory for tpu_custom_call.1']
    %18 = vsyncpa [#allocation5], 0
    %s19 = scalar_lea.sflag [#allocation5], 1
    %20 = vsyncpa %s19, 0
    loop: start=0, step=1, limit=4
    $region2: #{tpu_custom_call.1} parent=1 // loop_pre_header
      _
    $region3: #{tpu_custom_call.1} parent=1 // loop_header
      %s22 = sphi 0, %s26
      %p23 = scmp.ge.s32.totalorder %s22, 4
      %s32 = sphi 0, %s34
      %s35 = sphi 0, %s32
      %s36 = sphi 0, %s35
      %s52 = sphi 0, %s36
      %s56 = sphi 0, %s56
      %s58 = sphi 0, %s56
      %s59 = sphi 0, %s58
      %s73 = sphi 0, %s59
      %s77 = sphi 0, %s77
      %s79 = sphi 0, %s77
      %s80 = sphi 0, %s79
      %s94 = sphi 0, %s80
      %s98 = sphi 0, %s98
      %s100 = sphi 0, %s98
      %s101 = sphi 0, %s100
      %s115 = sphi 0, %s101
      %s119 = sphi 0, %s119
      %s121 = sphi 0, %s119
      %s122 = sphi 0, %s121
      %s136 = sphi 0, %s122
      %s140 = sphi 0, %s140
      %s142 = sphi 0, %s140
      %s143 = sphi 0, %s142
      %s157 = sphi 0, %s143
      %s161 = sphi 0, %s161
      %s163 = sphi 0, %s161
      %s164 = sphi 0, %s163
      %s178 = sphi 0, %s164
      %s182 = sphi 0, %s182
      %s184 = sphi 0, %s182
      %s185 = sphi 0, %s184
      %s199 = sphi 0, %s185
      %s203 = sphi 0, %s203
      %s205 = sphi 0, %s203
      %s206 = sphi 0, %s205
      %s220 = sphi 0, %s206
      %s224 = sphi 0, %s224
      %s226 = sphi 0, %s224
      %s227 = sphi 0, %s226
      %s241 = sphi 0, %s227
      %s245 = sphi 0, %s245
      %s247 = sphi 0, %s245
      %s248 = sphi 0, %s247
      %s262 = sphi 0, %s248
      %s266 = sphi 0, %s266
      %s268 = sphi 0, %s266
      %s269 = sphi 0, %s268
      %s283 = sphi 0, %s269
      %s287 = sphi 0, %s287
      %s289 = sphi 0, %s287
      %s290 = sphi 0, %s289
      %s304 = sphi 0, %s290
      %s310 = sphi 0, %s312
      %s313 = sphi 0, %s310
      %s314 = sphi 0, %s313
      %s330 = sphi 0, %s314
    $region4: #{tpu_custom_call.1} parent=1 // loop_header_branch
      %25 = sbr.rel (%p23) target = $region8
    $region5: #{tpu_custom_call.1} parent=1 // loop_body
      %s27 = ssub.s32 %s22, 1
      %s28 = ssub.s32 %s22, 2
      %s29 = sadd.s32 %s22, 1
      %s30 = ssub.s32 %s22, %s29
      %p31 = scmp.eq.s32.totalorder %s30, 0
      %s33 = sadd.s32 %s32, 1
      %s34 = scalar_select %p31, %s32, %s33
      %p37 = pneg %p31
      %p38 = scmp.eq.s32.totalorder %s22, 1
      %p39 = por %p37, %p38
      %p40 = scmp.ne.s32.totalorder %s32, %s35
      %p41 = scmp.eq.s32.totalorder %s22, 0
      %p42 = por %p40, %p41
      %p43 = scmp.ne.s32.totalorder %s32, %s35
      %p44 = scmp.eq.s32.totalorder %s27, 1
      %p45 = por %p43, %p44
      %p46 = scmp.ne.s32.totalorder %s35, %s36
      %p47 = scmp.eq.s32.totalorder %s27, 0
      %p48 = por %p46, %p47
      %p49 = scmp.ne.s32.totalorder %s35, %s36
      %p50 = scmp.eq.s32.totalorder %s28, 1
      %p51 = por %p49, %p50
      %p53 = scmp.ne.s32.totalorder %s36, %s52
      %p54 = scmp.eq.s32.totalorder %s28, 0
      %p55 = por %p53, %p54
      %s57 = sadd.s32 %s56, 1
      %p60 = scmp.eq.s32.totalorder %s22, 1
      %p61 = scmp.ne.s32.totalorder %s56, %s58
      %p62 = scmp.eq.s32.totalorder %s22, 0
      %p63 = por %p61, %p62
      %p64 = scmp.ne.s32.totalorder %s56, %s58
      %p65 = scmp.eq.s32.totalorder %s27, 1
      %p66 = por %p64, %p65
      %p67 = scmp.ne.s32.totalorder %s58, %s59
      %p68 = scmp.eq.s32.totalorder %s27, 0
      %p69 = por %p67, %p68
      %p70 = scmp.ne.s32.totalorder %s58, %s59
      %p71 = scmp.eq.s32.totalorder %s28, 1
      %p72 = por %p70, %p71
      %p74 = scmp.ne.s32.totalorder %s59, %s73
      %p75 = scmp.eq.s32.totalorder %s28, 0
      %p76 = por %p74, %p75
      %s78 = sadd.s32 %s77, 1
      %p81 = scmp.eq.s32.totalorder %s22, 1
      %p82 = scmp.ne.s32.totalorder %s77, %s79
      %p83 = scmp.eq.s32.totalorder %s22, 0
      %p84 = por %p82, %p83
      %p85 = scmp.ne.s32.totalorder %s77, %s79
      %p86 = scmp.eq.s32.totalorder %s27, 1
      %p87 = por %p85, %p86
      %p88 = scmp.ne.s32.totalorder %s79, %s80
      %p89 = scmp.eq.s32.totalorder %s27, 0
      %p90 = por %p88, %p89
      %p91 = scmp.ne.s32.totalorder %s79, %s80
      %p92 = scmp.eq.s32.totalorder %s28, 1
      %p93 = por %p91, %p92
      %p95 = scmp.ne.s32.totalorder %s80, %s94
      %p96 = scmp.eq.s32.totalorder %s28, 0
      %p97 = por %p95, %p96
      %s99 = sadd.s32 %s98, 1
      %p102 = scmp.eq.s32.totalorder %s22, 1
      %p103 = scmp.ne.s32.totalorder %s98, %s100
      %p104 = scmp.eq.s32.totalorder %s22, 0
      %p105 = por %p103, %p104
      %p106 = scmp.ne.s32.totalorder %s98, %s100
      %p107 = scmp.eq.s32.totalorder %s27, 1
      %p108 = por %p106, %p107
      %p109 = scmp.ne.s32.totalorder %s100, %s101
      %p110 = scmp.eq.s32.totalorder %s27, 0
      %p111 = por %p109, %p110
      %p112 = scmp.ne.s32.totalorder %s100, %s101
      %p113 = scmp.eq.s32.totalorder %s28, 1
      %p114 = por %p112, %p113
      %p116 = scmp.ne.s32.totalorder %s101, %s115
      %p117 = scmp.eq.s32.totalorder %s28, 0
      %p118 = por %p116, %p117
      %s120 = sadd.s32 %s119, 1
      %p123 = scmp.eq.s32.totalorder %s22, 1
      %p124 = scmp.ne.s32.totalorder %s119, %s121
      %p125 = scmp.eq.s32.totalorder %s22, 0
      %p126 = por %p124, %p125
      %p127 = scmp.ne.s32.totalorder %s119, %s121
      %p128 = scmp.eq.s32.totalorder %s27, 1
      %p129 = por %p127, %p128
      %p130 = scmp.ne.s32.totalorder %s121, %s122
      %p131 = scmp.eq.s32.totalorder %s27, 0
      %p132 = por %p130, %p131
      %p133 = scmp.ne.s32.totalorder %s121, %s122
      %p134 = scmp.eq.s32.totalorder %s28, 1
      %p135 = por %p133, %p134
      %p137 = scmp.ne.s32.totalorder %s122, %s136
      %p138 = scmp.eq.s32.totalorder %s28, 0
      %p139 = por %p137, %p138
      %s141 = sadd.s32 %s140, 1
      %p144 = scmp.eq.s32.totalorder %s22, 1
      %p145 = scmp.ne.s32.totalorder %s140, %s142
      %p146 = scmp.eq.s32.totalorder %s22, 0
      %p147 = por %p145, %p146
      %p148 = scmp.ne.s32.totalorder %s140, %s142
      %p149 = scmp.eq.s32.totalorder %s27, 1
      %p150 = por %p148, %p149
      %p151 = scmp.ne.s32.totalorder %s142, %s143
      %p152 = scmp.eq.s32.totalorder %s27, 0
      %p153 = por %p151, %p152
      %p154 = scmp.ne.s32.totalorder %s142, %s143
      %p155 = scmp.eq.s32.totalorder %s28, 1
      %p156 = por %p154, %p155
      %p158 = scmp.ne.s32.totalorder %s143, %s157
      %p159 = scmp.eq.s32.totalorder %s28, 0
      %p160 = por %p158, %p159
      %s162 = sadd.s32 %s161, 1
      %p165 = scmp.eq.s32.totalorder %s22, 1
      %p166 = scmp.ne.s32.totalorder %s161, %s163
      %p167 = scmp.eq.s32.totalorder %s22, 0
      %p168 = por %p166, %p167
      %p169 = scmp.ne.s32.totalorder %s161, %s163
      %p170 = scmp.eq.s32.totalorder %s27, 1
      %p171 = por %p169, %p170
      %p172 = scmp.ne.s32.totalorder %s163, %s164
      %p173 = scmp.eq.s32.totalorder %s27, 0
      %p174 = por %p172, %p173
      %p175 = scmp.ne.s32.totalorder %s163, %s164
      %p176 = scmp.eq.s32.totalorder %s28, 1
      %p177 = por %p175, %p176
      %p179 = scmp.ne.s32.totalorder %s164, %s178
      %p180 = scmp.eq.s32.totalorder %s28, 0
      %p181 = por %p179, %p180
      %s183 = sadd.s32 %s182, 1
      %p186 = scmp.eq.s32.totalorder %s22, 1
      %p187 = scmp.ne.s32.totalorder %s182, %s184
      %p188 = scmp.eq.s32.totalorder %s22, 0
      %p189 = por %p187, %p188
      %p190 = scmp.ne.s32.totalorder %s182, %s184
      %p191 = scmp.eq.s32.totalorder %s27, 1
      %p192 = por %p190, %p191
      %p193 = scmp.ne.s32.totalorder %s184, %s185
      %p194 = scmp.eq.s32.totalorder %s27, 0
      %p195 = por %p193, %p194
      %p196 = scmp.ne.s32.totalorder %s184, %s185
      %p197 = scmp.eq.s32.totalorder %s28, 1
      %p198 = por %p196, %p197
      %p200 = scmp.ne.s32.totalorder %s185, %s199
      %p201 = scmp.eq.s32.totalorder %s28, 0
      %p202 = por %p200, %p201
      %s204 = sadd.s32 %s203, 1
      %p207 = scmp.eq.s32.totalorder %s22, 1
      %p208 = scmp.ne.s32.totalorder %s203, %s205
      %p209 = scmp.eq.s32.totalorder %s22, 0
      %p210 = por %p208, %p209
      %p211 = scmp.ne.s32.totalorder %s203, %s205
      %p212 = scmp.eq.s32.totalorder %s27, 1
      %p213 = por %p211, %p212
      %p214 = scmp.ne.s32.totalorder %s205, %s206
      %p215 = scmp.eq.s32.totalorder %s27, 0
      %p216 = por %p214, %p215
      %p217 = scmp.ne.s32.totalorder %s205, %s206
      %p218 = scmp.eq.s32.totalorder %s28, 1
      %p219 = por %p217, %p218
      %p221 = scmp.ne.s32.totalorder %s206, %s220
      %p222 = scmp.eq.s32.totalorder %s28, 0
      %p223 = por %p221, %p222
      %s225 = sadd.s32 %s224, 1
      %p228 = scmp.eq.s32.totalorder %s22, 1
      %p229 = scmp.ne.s32.totalorder %s224, %s226
      %p230 = scmp.eq.s32.totalorder %s22, 0
      %p231 = por %p229, %p230
      %p232 = scmp.ne.s32.totalorder %s224, %s226
      %p233 = scmp.eq.s32.totalorder %s27, 1
      %p234 = por %p232, %p233
      %p235 = scmp.ne.s32.totalorder %s226, %s227
      %p236 = scmp.eq.s32.totalorder %s27, 0
      %p237 = por %p235, %p236
      %p238 = scmp.ne.s32.totalorder %s226, %s227
      %p239 = scmp.eq.s32.totalorder %s28, 1
      %p240 = por %p238, %p239
      %p242 = scmp.ne.s32.totalorder %s227, %s241
      %p243 = scmp.eq.s32.totalorder %s28, 0
      %p244 = por %p242, %p243
      %s246 = sadd.s32 %s245, 1
      %p249 = scmp.eq.s32.totalorder %s22, 1
      %p250 = scmp.ne.s32.totalorder %s245, %s247
      %p251 = scmp.eq.s32.totalorder %s22, 0
      %p252 = por %p250, %p251
      %p253 = scmp.ne.s32.totalorder %s245, %s247
      %p254 = scmp.eq.s32.totalorder %s27, 1
      %p255 = por %p253, %p254
      %p256 = scmp.ne.s32.totalorder %s247, %s248
      %p257 = scmp.eq.s32.totalorder %s27, 0
      %p258 = por %p256, %p257
      %p259 = scmp.ne.s32.totalorder %s247, %s248
      %p260 = scmp.eq.s32.totalorder %s28, 1
      %p261 = por %p259, %p260
      %p263 = scmp.ne.s32.totalorder %s248, %s262
      %p264 = scmp.eq.s32.totalorder %s28, 0
      %p265 = por %p263, %p264
      %s267 = sadd.s32 %s266, 1
      %p270 = scmp.eq.s32.totalorder %s22, 1
      %p271 = scmp.ne.s32.totalorder %s266, %s268
      %p272 = scmp.eq.s32.totalorder %s22, 0
      %p273 = por %p271, %p272
      %p274 = scmp.ne.s32.totalorder %s266, %s268
      %p275 = scmp.eq.s32.totalorder %s27, 1
      %p276 = por %p274, %p275
      %p277 = scmp.ne.s32.totalorder %s268, %s269
      %p278 = scmp.eq.s32.totalorder %s27, 0
      %p279 = por %p277, %p278
      %p280 = scmp.ne.s32.totalorder %s268, %s269
      %p281 = scmp.eq.s32.totalorder %s28, 1
      %p282 = por %p280, %p281
      %p284 = scmp.ne.s32.totalorder %s269, %s283
      %p285 = scmp.eq.s32.totalorder %s28, 0
      %p286 = por %p284, %p285
      %s288 = sadd.s32 %s287, 1
      %p291 = scmp.eq.s32.totalorder %s22, 1
      %p292 = scmp.ne.s32.totalorder %s287, %s289
      %p293 = scmp.eq.s32.totalorder %s22, 0
      %p294 = por %p292, %p293
      %p295 = scmp.ne.s32.totalorder %s287, %s289
      %p296 = scmp.eq.s32.totalorder %s27, 1
      %p297 = por %p295, %p296
      %p298 = scmp.ne.s32.totalorder %s289, %s290
      %p299 = scmp.eq.s32.totalorder %s27, 0
      %p300 = por %p298, %p299
      %p301 = scmp.ne.s32.totalorder %s289, %s290
      %p302 = scmp.eq.s32.totalorder %s28, 1
      %p303 = por %p301, %p302
      %p305 = scmp.ne.s32.totalorder %s290, %s304
      %p306 = scmp.eq.s32.totalorder %s28, 0
      %p307 = por %p305, %p306
      %s308 = ssub.s32 %s22, %s29
      %p309 = scmp.eq.s32.totalorder %s308, 0
      %s311 = sadd.s32 %s310, 1
      %s312 = scalar_select %p309, %s310, %s311
      %p315 = pneg %p309
      %p316 = scmp.eq.s32.totalorder %s22, 1
      %p317 = por %p315, %p316
      %p318 = scmp.ne.s32.totalorder %s310, %s313
      %p319 = scmp.eq.s32.totalorder %s22, 0
      %p320 = por %p318, %p319
      %p321 = scmp.ne.s32.totalorder %s310, %s313
      %p322 = scmp.eq.s32.totalorder %s27, 1
      %p323 = por %p321, %p322
      %p324 = scmp.ne.s32.totalorder %s313, %s314
      %p325 = scmp.eq.s32.totalorder %s27, 0
      %p326 = por %p324, %p325
      %p327 = scmp.ne.s32.totalorder %s313, %s314
      %p328 = scmp.eq.s32.totalorder %s28, 1
      %p329 = por %p327, %p328
      %p331 = scmp.ne.s32.totalorder %s314, %s330
      %p332 = scmp.eq.s32.totalorder %s28, 0
      %p333 = por %p331, %p332
      %p334 = scmp.le.s32.totalorder 1, %s22
      %p335 = scmp.lt.s32.totalorder %s22, 3
      %p336 = pnand %p334, %p335
      %p337 = pneg %p336
      // Predicated region
      $region9: #{tpu_custom_call.1} parent=5 // pred_check
        _
      $region10: #{tpu_custom_call.1} parent=5 // pred_check_branch
        %339 = sbr.rel (%p336) target = $region12
      $region11: #{tpu_custom_call.1} parent=5 // pred_region
        %s340 = ssub.s32 %s22, 1
        // Predicated region
        $region13: #{tpu_custom_call.1} parent=11 // pred_check
          %p341 = pneg %p69
        $region14: #{tpu_custom_call.1} parent=11 // pred_check_branch
          %343 = sbr.rel (%p341) target = $region16
        $region15: #{tpu_custom_call.1} parent=11 // pred_region
          _
        $region16: #{tpu_custom_call.1} parent=11 // pred_fallthru
          _
        // Predicated region
        $region17: #{tpu_custom_call.1} parent=11 // pred_check
          %p344 = pneg %p90
        $region18: #{tpu_custom_call.1} parent=11 // pred_check_branch
          %346 = sbr.rel (%p344) target = $region20
        $region19: #{tpu_custom_call.1} parent=11 // pred_region
          _
        $region20: #{tpu_custom_call.1} parent=11 // pred_fallthru
          _
        // Predicated region
        $region21: #{tpu_custom_call.1} parent=11 // pred_check
          %p347 = pneg %p111
        $region22: #{tpu_custom_call.1} parent=11 // pred_check_branch
          %349 = sbr.rel (%p347) target = $region24
        $region23: #{tpu_custom_call.1} parent=11 // pred_region
          _
        $region24: #{tpu_custom_call.1} parent=11 // pred_fallthru
          _
        // Predicated region
        $region25: #{tpu_custom_call.1} parent=11 // pred_check
          %p350 = pneg %p132
        $region26: #{tpu_custom_call.1} parent=11 // pred_check_branch
          %352 = sbr.rel (%p350) target = $region28
        $region27: #{tpu_custom_call.1} parent=11 // pred_region
          _
        $region28: #{tpu_custom_call.1} parent=11 // pred_fallthru
          _
        // Predicated region
        $region29: #{tpu_custom_call.1} parent=11 // pred_check
          %p353 = pneg %p153
        $region30: #{tpu_custom_call.1} parent=11 // pred_check_branch
          %355 = sbr.rel (%p353) target = $region32
        $region31: #{tpu_custom_call.1} parent=11 // pred_region
          _
        $region32: #{tpu_custom_call.1} parent=11 // pred_fallthru
          _
        // Predicated region
        $region33: #{tpu_custom_call.1} parent=11 // pred_check
          %p356 = pneg %p174
        $region34: #{tpu_custom_call.1} parent=11 // pred_check_branch
          %358 = sbr.rel (%p356) target = $region36
        $region35: #{tpu_custom_call.1} parent=11 // pred_region
          _
        $region36: #{tpu_custom_call.1} parent=11 // pred_fallthru
          _
        // Predicated region
        $region37: #{tpu_custom_call.1} parent=11 // pred_check
          %p359 = pneg %p195
        $region38: #{tpu_custom_call.1} parent=11 // pred_check_branch
          %361 = sbr.rel (%p359) target = $region40
        $region39: #{tpu_custom_call.1} parent=11 // pred_region
          _
        $region40: #{tpu_custom_call.1} parent=11 // pred_fallthru
          _
        // Predicated region
        $region41: #{tpu_custom_call.1} parent=11 // pred_check
          %p362 = pneg %p216
        $region42: #{tpu_custom_call.1} parent=11 // pred_check_branch
          %364 = sbr.rel (%p362) target = $region44
        $region43: #{tpu_custom_call.1} parent=11 // pred_region
          _
        $region44: #{tpu_custom_call.1} parent=11 // pred_fallthru
          _
        // Predicated region
        $region45: #{tpu_custom_call.1} parent=11 // pred_check
          %p365 = pneg %p237
        $region46: #{tpu_custom_call.1} parent=11 // pred_check_branch
          %367 = sbr.rel (%p365) target = $region48
        $region47: #{tpu_custom_call.1} parent=11 // pred_region
          _
        $region48: #{tpu_custom_call.1} parent=11 // pred_fallthru
          _
        // Predicated region
        $region49: #{tpu_custom_call.1} parent=11 // pred_check
          %p368 = pneg %p258
        $region50: #{tpu_custom_call.1} parent=11 // pred_check_branch
          %370 = sbr.rel (%p368) target = $region52
        $region51: #{tpu_custom_call.1} parent=11 // pred_region
          _
        $region52: #{tpu_custom_call.1} parent=11 // pred_fallthru
          _
        // Predicated region
        $region53: #{tpu_custom_call.1} parent=11 // pred_check
          %p371 = pneg %p279
        $region54: #{tpu_custom_call.1} parent=11 // pred_check_branch
          %373 = sbr.rel (%p371) target = $region56
        $region55: #{tpu_custom_call.1} parent=11 // pred_region
          _
        $region56: #{tpu_custom_call.1} parent=11 // pred_fallthru
          _
        // Predicated region
        $region57: #{tpu_custom_call.1} parent=11 // pred_check
          %p374 = pneg %p300
        $region58: #{tpu_custom_call.1} parent=11 // pred_check_branch
          %376 = sbr.rel (%p374) target = $region60
        $region59: #{tpu_custom_call.1} parent=11 // pred_region
          _
        $region60: #{tpu_custom_call.1} parent=11 // pred_fallthru
          _
      $region12: #{tpu_custom_call.1} parent=5 // pred_fallthru
        _
      %p377 = scmp.lt.s32.totalorder %s22, 2
      // Predicated region
      $region61: #{tpu_custom_call.1} parent=5 // pred_check
        %p378 = pneg %p377
      $region62: #{tpu_custom_call.1} parent=5 // pred_check_branch
        %380 = sbr.rel (%p378) target = $region64
      $region63: #{tpu_custom_call.1} parent=5 // pred_region
        // Predicated region
        $region65: #{tpu_custom_call.1} parent=63 // pred_check
          %p381 = pneg %p42
        $region66: #{tpu_custom_call.1} parent=63 // pred_check_branch
          %383 = sbr.rel (%p381) target = $region68
        $region67: #{tpu_custom_call.1} parent=63 // pred_region
          %p384 = scmp.lt.s32.totalorder %s22, 1
          %s385 = scalar_select %p384, %s22, 1
          %s386 = smul.addr %s385, 8
          %s387 = scalar_lea.vmem %s0, %s386
        $region68: #{tpu_custom_call.1} parent=63 // pred_fallthru
          _
      $region64: #{tpu_custom_call.1} parent=5 // pred_fallthru
        _
      %p388 = scmp.le.s32.totalorder 1, %s22
      %p389 = scmp.lt.s32.totalorder %s22, 3
      %p390 = pnand %p388, %p389
      %p391 = pneg %p390
      // Predicated region
      $region69: #{tpu_custom_call.1} parent=5 // pred_check
        _
      $region70: #{tpu_custom_call.1} parent=5 // pred_check_branch
        %393 = sbr.rel (%p390) target = $region72
      $region71: #{tpu_custom_call.1} parent=5 // pred_region
        %s394 = ssub.s32 %s22, 1
        %p395 = scmp.lt.s32.totalorder %s27, 1
        %s396 = scalar_select %p395, %s27, 1
        %s397 = smul.addr %s396, 8
        %s398 = scalar_lea.vmem %s0, %s397
        %p399 = pneg %p48
        %p400 = pneg %p45
        %p401 = pneg %p69
        %p402 = pneg %p66
        %p403 = pneg %p90
        %p404 = pneg %p87
        %p405 = pneg %p111
        %p406 = pneg %p108
        %p407 = pneg %p132
        %p408 = pneg %p129
        %p409 = pneg %p153
        %p410 = pneg %p150
        %p411 = pneg %p174
        %p412 = pneg %p171
        %p413 = pneg %p195
        %p414 = pneg %p192
        %p415 = pneg %p216
        %p416 = pneg %p213
        %p417 = pneg %p237
        %p418 = pneg %p234
        %p419 = pneg %p258
        %p420 = pneg %p255
        %p421 = pneg %p279
        %p422 = pneg %p276
        %p423 = pneg %p300
        %p424 = pneg %p297
        %p425 = pneg %p326
        %p426 = pneg %p323
        %s427 = sand.u32 %s313, 1
        %s428 = scalar_lea.sflag [#allocation5], %s427
        %s429 = sand.u32 %s313, 1
        %s430 = smul.addr %s429, 8
        %s431 = scalar_lea.vmem [#allocation4], %s430
        %p432 = scmp.lt.s32.totalorder %s27, 1
        %s433 = scalar_select %p432, %s27, 1
        %s434 = smul.addr %s433, 8
        %s435 = scalar_lea.vmem %s0, %s434
        %v437 = vld [vmem:[%s435] sm:$0xff]
        %vm438 = vcmask 261120
        %v439 = vsel %vm438, %v437, 0.0
        %440 = vadd.xlane.f32.xlu0 %v439
        %v441 = vpop.xlane.xlu0 %440
        %v442 = vrcp.pop 32.0
        %v443 = vmul.f32 %v441, %v442
        %v444 = vsub.f32 %v437, %v443
        %v445 = vmul.f32 %v444, %v444
        %v446 = vsel %vm438, %v445, 0.0
        %447 = vadd.xlane.f32.xlu0 %v446
        %v448 = vpop.xlane.xlu0 %447
        %v449 = vmul.f32 %v448, %v442
        %v450 = vadd.f32 %v449, 1e-05
        %v451 = vrsqrt.pop %v450
        %v452 = vmul.f32 %v444, %v451
        %v453 = vld [vmem:[%s1] sm:$0x1]
        %v455 = vlaneseq
        %v456 = vshrl.u32 %v455, 7
        %v457 = vsub.s32 0, %v456
        %v458 = vrot.slane %v453, %v457
        %v460 = vmul.f32 %v452, %v458
        %v461 = vld [vmem:[%s2] sm:$0x1]
        %v463 = vlaneseq
        %v464 = vshrl.u32 %v463, 7
        %v465 = vsub.s32 0, %v464
        %v466 = vrot.slane %v461, %v465
        %v468 = vadd.f32 %v460, %v466
        %v469 = vpack.c.bf16 %v468, %v468
        %v470 = vld [vmem:[%s3] sm:$0xf]
        %v471 = vld [vmem:[%s3 + $0x4] sm:$0xf]
        %v472 = vld [vmem:[%s3 + $0x8] sm:$0xf]
        %v473 = vld [vmem:[%s3 + $0xc] sm:$0xf]
        %v474 = vld [vmem:[%s4] sm:$0x1]
        %v476 = vlaneseq
        %v477 = vshrl.u32 %v476, 7
        %v478 = vsub.s32 0, %v477
        %v479 = vrot.slane %v474, %v478
        %v485 = vunpack.c.l.b16 %v470
        %v486 = vunpack.c.l.b16 %v471
        %v487 = vunpack.c.l.b16 %v472
        %v488 = vunpack.c.l.b16 %v473
        %v489 = vpack.c.b16 %v486, %v485
        %v490 = vpack.c.b16 %v488, %v487
        %v494 = vsel %vm438, %v469, 0
        %496 = vmatprep.subr.bf16.mxu0 0
        %497 = vmatpush1.bf16.msra.mxu0 0
        %498 = vmatprep.subr.bf16.mxu0 0
        %499 = vmatpush1.bf16.msra.mxu0 0
        %500 = vmatprep.subr.bf16.mxu0 0
        %501 = vmatpush1.bf16.msra.mxu0 0
        %502 = vmatprep.subr.bf16.mxu0 0
        %503 = vmatpush1.bf16.msra.mxu0 0
        %504 = vmatprep.subr.bf16.mxu0 0
        %505 = vmatpush1.bf16.msra.mxu0 0
        %506 = vmatprep.subr.bf16.mxu0 0
        %507 = vmatpush1.bf16.msra.mxu0 0
        %508 = vmatprep.subr.bf16.mxu0 0
        %509 = vmatpush1.bf16.msra.mxu0 %v490
        %510 = vmatprep.subr.bf16.mxu0 0
        %511 = vmatpush1.bf16.msra.mxu0 %v489
        %512 = vmatprep.subr.bf16.mxu0 0
        %513 = vmatpush2.bf16.msra.mxu0 0
        %514 = vmatprep.subr.bf16.mxu0 0
        %515 = vmatpush2.bf16.msra.mxu0 0
        %516 = vmatprep.subr.bf16.mxu0 0
        %517 = vmatpush2.bf16.msra.mxu0 0
        %518 = vmatprep.subr.bf16.mxu0 0
        %519 = vmatpush2.bf16.msra.mxu0 0
        %520 = vmatprep.subr.bf16.mxu0 0
        %521 = vmatpush2.bf16.msra.mxu0 0
        %522 = vmatprep.subr.bf16.mxu0 0
        %523 = vmatpush2.bf16.msra.mxu0 0
        %524 = vmatprep.subr.bf16.mxu0 0
        %525 = vmatpush2.bf16.msra.mxu0 0
        %526 = vmatprep.subr.bf16.mxu0 0
        %527 = vmatpush2.bf16.msra.mxu0 0
        %528 = vmatprep.mubr.bf16.mxu0 0
        %529 = vmatmul.mubr.bf16.gmra.mxu0 %v494
        %v530 = vpop.f32.mrf.mxu0
        %v531 = vadd.f32 %v479, %v530
        %v532 = vpop.f32.mrf.mxu0
        %v533 = vpop.f32.mrf.mxu0
        %v534 = vpop.f32.mrf.mxu0
        %535 = vdwg.mxu0
        %v536 = vpack.c.bf16 %v531, %v531
        %vm537 = vcmask 781312
        %538 = vst.msk [vmem:[#allocation2] sm:$0xf] %vm537, %v536
        %539 = vst.msk [vmem:[#allocation3] sm:$0xff] %vm438, 0.0
        %v540 = vld [vmem:[#allocation2] sm:$0xf]
        %v542 = vunpack.c.l.b16 %v540
        %v543 = vpack.c.b16 %v542, %v542
        %544 = vrot.lane.b32.xlu0 %v543, 96
        %v545 = vpop.permute.xlu0 %544
        %vm546 = vcmask 64512
        %v548 = vsel %vm546, %v540, 0
        %v551 = vsel %vm546, %v545, 0
        %553 = vmatprep.subr.bf16.mxu0 0
        %554 = vmatpush1.bf16.xpose.msra.mxu0 0
        %555 = vmatprep.subr.bf16.mxu0 0
        %556 = vmatpush1.bf16.xpose.msra.mxu0 0
        %557 = vmatprep.subr.bf16.mxu0 0
        %558 = vmatpush1.bf16.xpose.msra.mxu0 0
        %559 = vmatprep.subr.bf16.mxu0 0
        %560 = vmatpush1.bf16.xpose.msra.mxu0 0
        %561 = vmatprep.subr.bf16.mxu0 0
        %562 = vmatpush1.bf16.xpose.msra.mxu0 0
        %563 = vmatprep.subr.bf16.mxu0 0
        %564 = vmatpush1.bf16.xpose.msra.mxu0 0
        %565 = vmatprep.subr.bf16.mxu0 0
        %566 = vmatpush1.bf16.xpose.msra.mxu0 0
        %567 = vmatprep.subr.bf16.mxu0 0
        %568 = vmatpush1.bf16.xpose.msra.mxu0 %v551
        %569 = vmatprep.subr.bf16.mxu0 0
        %570 = vmatpush2.bf16.xpose.msra.mxu0 0
        %571 = vmatprep.subr.bf16.mxu0 0
        %572 = vmatpush2.bf16.xpose.msra.mxu0 0
        %573 = vmatprep.subr.bf16.mxu0 0
        %574 = vmatpush2.bf16.xpose.msra.mxu0 0
        %575 = vmatprep.subr.bf16.mxu0 0
        %576 = vmatpush2.bf16.xpose.msra.mxu0 0
        %577 = vmatprep.subr.bf16.mxu0 0
        %578 = vmatpush2.bf16.xpose.msra.mxu0 0
        %579 = vmatprep.subr.bf16.mxu0 0
        %580 = vmatpush2.bf16.xpose.msra.mxu0 0
        %581 = vmatprep.subr.bf16.mxu0 0
        %582 = vmatpush2.bf16.xpose.msra.mxu0 0
        %583 = vmatprep.subr.bf16.mxu0 0
        %584 = vmatpush2.bf16.xpose.msra.mxu0 0
        %585 = vmatprep.mubr.bf16.mxu0 0
        %586 = vmatmul.mubr.bf16.gmra.mxu0 %v548
        %v587 = vpop.f32.mrf.mxu0
        %v588 = vadd.f32 0.0, %v587
        %v589 = vpop.f32.mrf.mxu0
        %v590 = vpop.f32.mrf.mxu0
        %v591 = vpop.f32.mrf.mxu0
        %592 = vdwg.mxu0
        %v593 = vsel %vm546, %v588, -inf
        %594 = vmax.xlane.f32.xlu0 %v593
        %v595 = vpop.xlane.xlu0 %594
        %v596 = vsub.f32 %v588, %v595
        %v597 = vmul.f32 %v596, 1.442695
        %v598 = vpow.pop %v597
        %v599 = vsel %vm546, %v598, 0.0
        %600 = vadd.xlane.f32.xlu0 %v599
        %v601 = vpop.xlane.xlu0 %600
        %v602 = vrcp.pop %v601
        %v603 = vmul.f32 %v598, %v602
        %v604 = vpack.c.bf16 %v603, %v603
        %605 = vrot.lane.b32.xlu0 %v543, 64
        %v606 = vpop.permute.xlu0 %605
        %v608 = vsel %vm546, %v604, 0
        %vm610 = vcmask 1043456
        %v612 = vsel %vm610, %v606, 0
        %614 = vmatprep.subr.bf16.mxu0 0
        %615 = vmatpush1.bf16.msra.mxu0 0
        %616 = vmatprep.subr.bf16.mxu0 0
        %617 = vmatpush1.bf16.msra.mxu0 0
        %618 = vmatprep.subr.bf16.mxu0 0
        %619 = vmatpush1.bf16.msra.mxu0 0
        %620 = vmatprep.subr.bf16.mxu0 0
        %621 = vmatpush1.bf16.msra.mxu0 0
        %622 = vmatprep.subr.bf16.mxu0 0
        %623 = vmatpush1.bf16.msra.mxu0 0
        %624 = vmatprep.subr.bf16.mxu0 0
        %625 = vmatpush1.bf16.msra.mxu0 0
        %626 = vmatprep.subr.bf16.mxu0 0
        %627 = vmatpush1.bf16.msra.mxu0 0
        %628 = vmatprep.subr.bf16.mxu0 0
        %629 = vmatpush1.bf16.msra.mxu0 %v612
        %630 = vmatprep.subr.bf16.mxu0 0
        %631 = vmatpush2.bf16.msra.mxu0 0
        %632 = vmatprep.subr.bf16.mxu0 0
        %633 = vmatpush2.bf16.msra.mxu0 0
        %634 = vmatprep.subr.bf16.mxu0 0
        %635 = vmatpush2.bf16.msra.mxu0 0
        %636 = vmatprep.subr.bf16.mxu0 0
        %637 = vmatpush2.bf16.msra.mxu0 0
        %638 = vmatprep.subr.bf16.mxu0 0
        %639 = vmatpush2.bf16.msra.mxu0 0
        %640 = vmatprep.subr.bf16.mxu0 0
        %641 = vmatpush2.bf16.msra.mxu0 0
        %642 = vmatprep.subr.bf16.mxu0 0
        %643 = vmatpush2.bf16.msra.mxu0 0
        %644 = vmatprep.subr.bf16.mxu0 0
        %645 = vmatpush2.bf16.msra.mxu0 0
        %646 = vmatprep.mubr.bf16.mxu0 0
        %647 = vmatmul.mubr.bf16.gmra.mxu0 %v608
        %v648 = vpop.f32.mrf.mxu0
        %v649 = vadd.f32 0.0, %v648
        %v650 = vpop.f32.mrf.mxu0
        %v651 = vpop.f32.mrf.mxu0
        %v652 = vpop.f32.mrf.mxu0
        %653 = vdwg.mxu0
        %v654 = vld [vmem:[#allocation3] sm:$0xff]
        %v655 = vpack.c.bf16 %v649, %v649
        %v656 = vld [vmem:[%s5] sm:$0xf]
        %v658 = vsel %vm546, %v655, 0
        %v661 = vsel %vm610, %v656, 0
        %663 = vmatprep.subr.bf16.mxu0 0
        %664 = vmatpush1.bf16.msra.mxu0 0
        %665 = vmatprep.subr.bf16.mxu0 0
        %666 = vmatpush1.bf16.msra.mxu0 0
        %667 = vmatprep.subr.bf16.mxu0 0
        %668 = vmatpush1.bf16.msra.mxu0 0
        %669 = vmatprep.subr.bf16.mxu0 0
        %670 = vmatpush1.bf16.msra.mxu0 0
        %671 = vmatprep.subr.bf16.mxu0 0
        %672 = vmatpush1.bf16.msra.mxu0 0
        %673 = vmatprep.subr.bf16.mxu0 0
        %674 = vmatpush1.bf16.msra.mxu0 0
        %675 = vmatprep.subr.bf16.mxu0 0
        %676 = vmatpush1.bf16.msra.mxu0 0
        %677 = vmatprep.subr.bf16.mxu0 0
        %678 = vmatpush1.bf16.msra.mxu0 %v661
        %679 = vmatprep.subr.bf16.mxu0 0
        %680 = vmatpush2.bf16.msra.mxu0 0
        %681 = vmatprep.subr.bf16.mxu0 0
        %682 = vmatpush2.bf16.msra.mxu0 0
        %683 = vmatprep.subr.bf16.mxu0 0
        %684 = vmatpush2.bf16.msra.mxu0 0
        %685 = vmatprep.subr.bf16.mxu0 0
        %686 = vmatpush2.bf16.msra.mxu0 0
        %687 = vmatprep.subr.bf16.mxu0 0
        %688 = vmatpush2.bf16.msra.mxu0 0
        %689 = vmatprep.subr.bf16.mxu0 0
        %690 = vmatpush2.bf16.msra.mxu0 0
        %691 = vmatprep.subr.bf16.mxu0 0
        %692 = vmatpush2.bf16.msra.mxu0 0
        %693 = vmatprep.subr.bf16.mxu0 0
        %694 = vmatpush2.bf16.msra.mxu0 0
        %695 = vmatprep.mubr.bf16.mxu0 0
        %696 = vmatmul.mubr.bf16.gmra.mxu0 %v658
        %v697 = vpop.f32.mrf.mxu0
        %v698 = vadd.f32 0.0, %v697
        %v699 = vpop.f32.mrf.mxu0
        %v700 = vpop.f32.mrf.mxu0
        %v701 = vpop.f32.mrf.mxu0
        %702 = vdwg.mxu0
        %v703 = vadd.f32 %v654, %v698
        %704 = vst.msk [vmem:[#allocation3] sm:$0xff] %vm438, %v703
        %v705 = vld [vmem:[#allocation2] sm:$0xf]
        %v707 = vunpack.c.l.b16 %v705
        %v708 = vpack.c.b16 %v707, %v707
        %709 = vrot.lane.b32.xlu0 %v708, 120
        %v710 = vpop.permute.xlu0 %709
        %711 = vrot.lane.b32.xlu0 %v708, 88
        %v712 = vpop.permute.xlu0 %711
        %v714 = vsel %vm546, %v710, 0
        %v717 = vsel %vm546, %v712, 0
        %719 = vmatprep.subr.bf16.mxu0 0
        %720 = vmatpush1.bf16.xpose.msra.mxu0 0
        %721 = vmatprep.subr.bf16.mxu0 0
        %722 = vmatpush1.bf16.xpose.msra.mxu0 0
        %723 = vmatprep.subr.bf16.mxu0 0
        %724 = vmatpush1.bf16.xpose.msra.mxu0 0
        %725 = vmatprep.subr.bf16.mxu0 0
        %726 = vmatpush1.bf16.xpose.msra.mxu0 0
        %727 = vmatprep.subr.bf16.mxu0 0
        %728 = vmatpush1.bf16.xpose.msra.mxu0 0
        %729 = vmatprep.subr.bf16.mxu0 0
        %730 = vmatpush1.bf16.xpose.msra.mxu0 0
        %731 = vmatprep.subr.bf16.mxu0 0
        %732 = vmatpush1.bf16.xpose.msra.mxu0 0
        %733 = vmatprep.subr.bf16.mxu0 0
        %734 = vmatpush1.bf16.xpose.msra.mxu0 %v717
        %735 = vmatprep.subr.bf16.mxu0 0
        %736 = vmatpush2.bf16.xpose.msra.mxu0 0
        %737 = vmatprep.subr.bf16.mxu0 0
        %738 = vmatpush2.bf16.xpose.msra.mxu0 0
        %739 = vmatprep.subr.bf16.mxu0 0
        %740 = vmatpush2.bf16.xpose.msra.mxu0 0
        %741 = vmatprep.subr.bf16.mxu0 0
        %742 = vmatpush2.bf16.xpose.msra.mxu0 0
        %743 = vmatprep.subr.bf16.mxu0 0
        %744 = vmatpush2.bf16.xpose.msra.mxu0 0
        %745 = vmatprep.subr.bf16.mxu0 0
        %746 = vmatpush2.bf16.xpose.msra.mxu0 0
        %747 = vmatprep.subr.bf16.mxu0 0
        %748 = vmatpush2.bf16.xpose.msra.mxu0 0
        %749 = vmatprep.subr.bf16.mxu0 0
        %750 = vmatpush2.bf16.xpose.msra.mxu0 0
        %751 = vmatprep.mubr.bf16.mxu0 0
        %752 = vmatmul.mubr.bf16.gmra.mxu0 %v714
        %v753 = vpop.f32.mrf.mxu0
        %v754 = vadd.f32 0.0, %v753
        %v755 = vpop.f32.mrf.mxu0
        %v756 = vpop.f32.mrf.mxu0
        %v757 = vpop.f32.mrf.mxu0
        %758 = vdwg.mxu0
        %v759 = vsel %vm546, %v754, -inf
        %760 = vmax.xlane.f32.xlu0 %v759
        %v761 = vpop.xlane.xlu0 %760
        %v762 = vsub.f32 %v754, %v761
        %v763 = vmul.f32 %v762, 1.442695
        %v764 = vpow.pop %v763
        %v765 = vsel %vm546, %v764, 0.0
        %766 = vadd.xlane.f32.xlu0 %v765
        %v767 = vpop.xlane.xlu0 %766
        %v768 = vrcp.pop %v767
        %v769 = vmul.f32 %v764, %v768
        %v770 = vpack.c.bf16 %v769, %v769
        %771 = vrot.lane.b32.xlu0 %v708, 56
        %v772 = vpop.permute.xlu0 %771
        %v774 = vsel %vm546, %v770, 0
        %v777 = vsel %vm610, %v772, 0
        %779 = vmatprep.subr.bf16.mxu0 0
        %780 = vmatpush1.bf16.msra.mxu0 0
        %781 = vmatprep.subr.bf16.mxu0 0
        %782 = vmatpush1.bf16.msra.mxu0 0
        %783 = vmatprep.subr.bf16.mxu0 0
        %784 = vmatpush1.bf16.msra.mxu0 0
        %785 = vmatprep.subr.bf16.mxu0 0
        %786 = vmatpush1.bf16.msra.mxu0 0
        %787 = vmatprep.subr.bf16.mxu0 0
        %788 = vmatpush1.bf16.msra.mxu0 0
        %789 = vmatprep.subr.bf16.mxu0 0
        %790 = vmatpush1.bf16.msra.mxu0 0
        %791 = vmatprep.subr.bf16.mxu0 0
        %792 = vmatpush1.bf16.msra.mxu0 0
        %793 = vmatprep.subr.bf16.mxu0 0
        %794 = vmatpush1.bf16.msra.mxu0 %v777
        %795 = vmatprep.subr.bf16.mxu0 0
        %796 = vmatpush2.bf16.msra.mxu0 0
        %797 = vmatprep.subr.bf16.mxu0 0
        %798 = vmatpush2.bf16.msra.mxu0 0
        %799 = vmatprep.subr.bf16.mxu0 0
        %800 = vmatpush2.bf16.msra.mxu0 0
        %801 = vmatprep.subr.bf16.mxu0 0
        %802 = vmatpush2.bf16.msra.mxu0 0
        %803 = vmatprep.subr.bf16.mxu0 0
        %804 = vmatpush2.bf16.msra.mxu0 0
        %805 = vmatprep.subr.bf16.mxu0 0
        %806 = vmatpush2.bf16.msra.mxu0 0
        %807 = vmatprep.subr.bf16.mxu0 0
        %808 = vmatpush2.bf16.msra.mxu0 0
        %809 = vmatprep.subr.bf16.mxu0 0
        %810 = vmatpush2.bf16.msra.mxu0 0
        %811 = vmatprep.mubr.bf16.mxu0 0
        %812 = vmatmul.mubr.bf16.gmra.mxu0 %v774
        %v813 = vpop.f32.mrf.mxu0
        %v814 = vadd.f32 0.0, %v813
        %v815 = vpop.f32.mrf.mxu0
        %v816 = vpop.f32.mrf.mxu0
        %v817 = vpop.f32.mrf.mxu0
        %818 = vdwg.mxu0
        %v819 = vld [vmem:[#allocation3] sm:$0xff]
        %v820 = vpack.c.bf16 %v814, %v814
        %v821 = vld [vmem:[%s5 + $0x4] sm:$0xf]
        %v823 = vsel %vm546, %v820, 0
        %v826 = vsel %vm610, %v821, 0
        %828 = vmatprep.subr.bf16.mxu0 0
        %829 = vmatpush1.bf16.msra.mxu0 0
        %830 = vmatprep.subr.bf16.mxu0 0
        %831 = vmatpush1.bf16.msra.mxu0 0
        %832 = vmatprep.subr.bf16.mxu0 0
        %833 = vmatpush1.bf16.msra.mxu0 0
        %834 = vmatprep.subr.bf16.mxu0 0
        %835 = vmatpush1.bf16.msra.mxu0 0
        %836 = vmatprep.subr.bf16.mxu0 0
        %837 = vmatpush1.bf16.msra.mxu0 0
        %838 = vmatprep.subr.bf16.mxu0 0
        %839 = vmatpush1.bf16.msra.mxu0 0
        %840 = vmatprep.subr.bf16.mxu0 0
        %841 = vmatpush1.bf16.msra.mxu0 0
        %842 = vmatprep.subr.bf16.mxu0 0
        %843 = vmatpush1.bf16.msra.mxu0 %v826
        %844 = vmatprep.subr.bf16.mxu0 0
        %845 = vmatpush2.bf16.msra.mxu0 0
        %846 = vmatprep.subr.bf16.mxu0 0
        %847 = vmatpush2.bf16.msra.mxu0 0
        %848 = vmatprep.subr.bf16.mxu0 0
        %849 = vmatpush2.bf16.msra.mxu0 0
        %850 = vmatprep.subr.bf16.mxu0 0
        %851 = vmatpush2.bf16.msra.mxu0 0
        %852 = vmatprep.subr.bf16.mxu0 0
        %853 = vmatpush2.bf16.msra.mxu0 0
        %854 = vmatprep.subr.bf16.mxu0 0
        %855 = vmatpush2.bf16.msra.mxu0 0
        %856 = vmatprep.subr.bf16.mxu0 0
        %857 = vmatpush2.bf16.msra.mxu0 0
        %858 = vmatprep.subr.bf16.mxu0 0
        %859 = vmatpush2.bf16.msra.mxu0 0
        %860 = vmatprep.mubr.bf16.mxu0 0
        %861 = vmatmul.mubr.bf16.gmra.mxu0 %v823
        %v862 = vpop.f32.mrf.mxu0
        %v863 = vadd.f32 0.0, %v862
        %v864 = vpop.f32.mrf.mxu0
        %v865 = vpop.f32.mrf.mxu0
        %v866 = vpop.f32.mrf.mxu0
        %867 = vdwg.mxu0
        %v868 = vadd.f32 %v819, %v863
        %869 = vst.msk [vmem:[#allocation3] sm:$0xff] %vm438, %v868
        %v870 = vld [vmem:[#allocation2] sm:$0xf]
        %v872 = vunpack.c.l.b16 %v870
        %v873 = vpack.c.b16 %v872, %v872
        %874 = vrot.lane.b32.xlu0 %v873, 112
        %v875 = vpop.permute.xlu0 %874
        %876 = vrot.lane.b32.xlu0 %v873, 80
        %v877 = vpop.permute.xlu0 %876
        %v879 = vsel %vm546, %v875, 0
        %v882 = vsel %vm546, %v877, 0
        %884 = vmatprep.subr.bf16.mxu0 0
        %885 = vmatpush1.bf16.xpose.msra.mxu0 0
        %886 = vmatprep.subr.bf16.mxu0 0
        %887 = vmatpush1.bf16.xpose.msra.mxu0 0
        %888 = vmatprep.subr.bf16.mxu0 0
        %889 = vmatpush1.bf16.xpose.msra.mxu0 0
        %890 = vmatprep.subr.bf16.mxu0 0
        %891 = vmatpush1.bf16.xpose.msra.mxu0 0
        %892 = vmatprep.subr.bf16.mxu0 0
        %893 = vmatpush1.bf16.xpose.msra.mxu0 0
        %894 = vmatprep.subr.bf16.mxu0 0
        %895 = vmatpush1.bf16.xpose.msra.mxu0 0
        %896 = vmatprep.subr.bf16.mxu0 0
        %897 = vmatpush1.bf16.xpose.msra.mxu0 0
        %898 = vmatprep.subr.bf16.mxu0 0
        %899 = vmatpush1.bf16.xpose.msra.mxu0 %v882
        %900 = vmatprep.subr.bf16.mxu0 0
        %901 = vmatpush2.bf16.xpose.msra.mxu0 0
        %902 = vmatprep.subr.bf16.mxu0 0
        %903 = vmatpush2.bf16.xpose.msra.mxu0 0
        %904 = vmatprep.subr.bf16.mxu0 0
        %905 = vmatpush2.bf16.xpose.msra.mxu0 0
        %906 = vmatprep.subr.bf16.mxu0 0
        %907 = vmatpush2.bf16.xpose.msra.mxu0 0
        %908 = vmatprep.subr.bf16.mxu0 0
        %909 = vmatpush2.bf16.xpose.msra.mxu0 0
        %910 = vmatprep.subr.bf16.mxu0 0
        %911 = vmatpush2.bf16.xpose.msra.mxu0 0
        %912 = vmatprep.subr.bf16.mxu0 0
        %913 = vmatpush2.bf16.xpose.msra.mxu0 0
        %914 = vmatprep.subr.bf16.mxu0 0
        %915 = vmatpush2.bf16.xpose.msra.mxu0 0
        %916 = vmatprep.mubr.bf16.mxu0 0
        %917 = vmatmul.mubr.bf16.gmra.mxu0 %v879
        %v918 = vpop.f32.mrf.mxu0
        %v919 = vadd.f32 0.0, %v918
        %v920 = vpop.f32.mrf.mxu0
        %v921 = vpop.f32.mrf.mxu0
        %v922 = vpop.f32.mrf.mxu0
        %923 = vdwg.mxu0
        %v924 = vsel %vm546, %v919, -inf
        %925 = vmax.xlane.f32.xlu0 %v924
        %v926 = vpop.xlane.xlu0 %925
        %v927 = vsub.f32 %v919, %v926
        %v928 = vmul.f32 %v927, 1.442695
        %v929 = vpow.pop %v928
        %v930 = vsel %vm546, %v929, 0.0
        %931 = vadd.xlane.f32.xlu0 %v930
        %v932 = vpop.xlane.xlu0 %931
        %v933 = vrcp.pop %v932
        %v934 = vmul.f32 %v929, %v933
        %v935 = vpack.c.bf16 %v934, %v934
        %936 = vrot.lane.b32.xlu0 %v873, 48
        %v937 = vpop.permute.xlu0 %936
        %v939 = vsel %vm546, %v935, 0
        %v942 = vsel %vm610, %v937, 0
        %944 = vmatprep.subr.bf16.mxu0 0
        %945 = vmatpush1.bf16.msra.mxu0 0
        %946 = vmatprep.subr.bf16.mxu0 0
        %947 = vmatpush1.bf16.msra.mxu0 0
        %948 = vmatprep.subr.bf16.mxu0 0
        %949 = vmatpush1.bf16.msra.mxu0 0
        %950 = vmatprep.subr.bf16.mxu0 0
        %951 = vmatpush1.bf16.msra.mxu0 0
        %952 = vmatprep.subr.bf16.mxu0 0
        %953 = vmatpush1.bf16.msra.mxu0 0
        %954 = vmatprep.subr.bf16.mxu0 0
        %955 = vmatpush1.bf16.msra.mxu0 0
        %956 = vmatprep.subr.bf16.mxu0 0
        %957 = vmatpush1.bf16.msra.mxu0 0
        %958 = vmatprep.subr.bf16.mxu0 0
        %959 = vmatpush1.bf16.msra.mxu0 %v942
        %960 = vmatprep.subr.bf16.mxu0 0
        %961 = vmatpush2.bf16.msra.mxu0 0
        %962 = vmatprep.subr.bf16.mxu0 0
        %963 = vmatpush2.bf16.msra.mxu0 0
        %964 = vmatprep.subr.bf16.mxu0 0
        %965 = vmatpush2.bf16.msra.mxu0 0
        %966 = vmatprep.subr.bf16.mxu0 0
        %967 = vmatpush2.bf16.msra.mxu0 0
        %968 = vmatprep.subr.bf16.mxu0 0
        %969 = vmatpush2.bf16.msra.mxu0 0
        %970 = vmatprep.subr.bf16.mxu0 0
        %971 = vmatpush2.bf16.msra.mxu0 0
        %972 = vmatprep.subr.bf16.mxu0 0
        %973 = vmatpush2.bf16.msra.mxu0 0
        %974 = vmatprep.subr.bf16.mxu0 0
        %975 = vmatpush2.bf16.msra.mxu0 0
        %976 = vmatprep.mubr.bf16.mxu0 0
        %977 = vmatmul.mubr.bf16.gmra.mxu0 %v939
        %v978 = vpop.f32.mrf.mxu0
        %v979 = vadd.f32 0.0, %v978
        %v980 = vpop.f32.mrf.mxu0
        %v981 = vpop.f32.mrf.mxu0
        %v982 = vpop.f32.mrf.mxu0
        %983 = vdwg.mxu0
        %v984 = vld [vmem:[#allocation3] sm:$0xff]
        %v985 = vpack.c.bf16 %v979, %v979
        %v986 = vld [vmem:[%s5 + $0x8] sm:$0xf]
        %v988 = vsel %vm546, %v985, 0
        %v991 = vsel %vm610, %v986, 0
        %993 = vmatprep.subr.bf16.mxu0 0
        %994 = vmatpush1.bf16.msra.mxu0 0
        %995 = vmatprep.subr.bf16.mxu0 0
        %996 = vmatpush1.bf16.msra.mxu0 0
        %997 = vmatprep.subr.bf16.mxu0 0
        %998 = vmatpush1.bf16.msra.mxu0 0
        %999 = vmatprep.subr.bf16.mxu0 0
        %1000 = vmatpush1.bf16.msra.mxu0 0
        %1001 = vmatprep.subr.bf16.mxu0 0
        %1002 = vmatpush1.bf16.msra.mxu0 0
        %1003 = vmatprep.subr.bf16.mxu0 0
        %1004 = vmatpush1.bf16.msra.mxu0 0
        %1005 = vmatprep.subr.bf16.mxu0 0
        %1006 = vmatpush1.bf16.msra.mxu0 0
        %1007 = vmatprep.subr.bf16.mxu0 0
        %1008 = vmatpush1.bf16.msra.mxu0 %v991
        %1009 = vmatprep.subr.bf16.mxu0 0
        %1010 = vmatpush2.bf16.msra.mxu0 0
        %1011 = vmatprep.subr.bf16.mxu0 0
        %1012 = vmatpush2.bf16.msra.mxu0 0
        %1013 = vmatprep.subr.bf16.mxu0 0
        %1014 = vmatpush2.bf16.msra.mxu0 0
        %1015 = vmatprep.subr.bf16.mxu0 0
        %1016 = vmatpush2.bf16.msra.mxu0 0
        %1017 = vmatprep.subr.bf16.mxu0 0
        %1018 = vmatpush2.bf16.msra.mxu0 0
        %1019 = vmatprep.subr.bf16.mxu0 0
        %1020 = vmatpush2.bf16.msra.mxu0 0
        %1021 = vmatprep.subr.bf16.mxu0 0
        %1022 = vmatpush2.bf16.msra.mxu0 0
        %1023 = vmatprep.subr.bf16.mxu0 0
        %1024 = vmatpush2.bf16.msra.mxu0 0
        %1025 = vmatprep.mubr.bf16.mxu0 0
        %1026 = vmatmul.mubr.bf16.gmra.mxu0 %v988
        %v1027 = vpop.f32.mrf.mxu0
        %v1028 = vadd.f32 0.0, %v1027
        %v1029 = vpop.f32.mrf.mxu0
        %v1030 = vpop.f32.mrf.mxu0
        %v1031 = vpop.f32.mrf.mxu0
        %1032 = vdwg.mxu0
        %v1033 = vadd.f32 %v984, %v1028
        %1034 = vst.msk [vmem:[#allocation3] sm:$0xff] %vm438, %v1033
        %v1035 = vld [vmem:[#allocation2] sm:$0xf]
        %v1037 = vunpack.c.l.b16 %v1035
        %v1038 = vpack.c.b16 %v1037, %v1037
        %1039 = vrot.lane.b32.xlu0 %v1038, 104
        %v1040 = vpop.permute.xlu0 %1039
        %1041 = vrot.lane.b32.xlu0 %v1038, 72
        %v1042 = vpop.permute.xlu0 %1041
        %v1044 = vsel %vm546, %v1040, 0
        %v1047 = vsel %vm546, %v1042, 0
        %1049 = vmatprep.subr.bf16.mxu0 0
        %1050 = vmatpush1.bf16.xpose.msra.mxu0 0
        %1051 = vmatprep.subr.bf16.mxu0 0
        %1052 = vmatpush1.bf16.xpose.msra.mxu0 0
        %1053 = vmatprep.subr.bf16.mxu0 0
        %1054 = vmatpush1.bf16.xpose.msra.mxu0 0
        %1055 = vmatprep.subr.bf16.mxu0 0
        %1056 = vmatpush1.bf16.xpose.msra.mxu0 0
        %1057 = vmatprep.subr.bf16.mxu0 0
        %1058 = vmatpush1.bf16.xpose.msra.mxu0 0
        %1059 = vmatprep.subr.bf16.mxu0 0
        %1060 = vmatpush1.bf16.xpose.msra.mxu0 0
        %1061 = vmatprep.subr.bf16.mxu0 0
        %1062 = vmatpush1.bf16.xpose.msra.mxu0 0
        %1063 = vmatprep.subr.bf16.mxu0 0
        %1064 = vmatpush1.bf16.xpose.msra.mxu0 %v1047
        %1065 = vmatprep.subr.bf16.mxu0 0
        %1066 = vmatpush2.bf16.xpose.msra.mxu0 0
        %1067 = vmatprep.subr.bf16.mxu0 0
        %1068 = vmatpush2.bf16.xpose.msra.mxu0 0
        %1069 = vmatprep.subr.bf16.mxu0 0
        %1070 = vmatpush2.bf16.xpose.msra.mxu0 0
        %1071 = vmatprep.subr.bf16.mxu0 0
        %1072 = vmatpush2.bf16.xpose.msra.mxu0 0
        %1073 = vmatprep.subr.bf16.mxu0 0
        %1074 = vmatpush2.bf16.xpose.msra.mxu0 0
        %1075 = vmatprep.subr.bf16.mxu0 0
        %1076 = vmatpush2.bf16.xpose.msra.mxu0 0
        %1077 = vmatprep.subr.bf16.mxu0 0
        %1078 = vmatpush2.bf16.xpose.msra.mxu0 0
        %1079 = vmatprep.subr.bf16.mxu0 0
        %1080 = vmatpush2.bf16.xpose.msra.mxu0 0
        %1081 = vmatprep.mubr.bf16.mxu0 0
        %1082 = vmatmul.mubr.bf16.gmra.mxu0 %v1044
        %v1083 = vpop.f32.mrf.mxu0
        %v1084 = vadd.f32 0.0, %v1083
        %v1085 = vpop.f32.mrf.mxu0
        %v1086 = vpop.f32.mrf.mxu0
        %v1087 = vpop.f32.mrf.mxu0
        %1088 = vdwg.mxu0
        %v1089 = vsel %vm546, %v1084, -inf
        %1090 = vmax.xlane.f32.xlu0 %v1089
        %v1091 = vpop.xlane.xlu0 %1090
        %v1092 = vsub.f32 %v1084, %v1091
        %v1093 = vmul.f32 %v1092, 1.442695
        %v1094 = vpow.pop %v1093
        %v1095 = vsel %vm546, %v1094, 0.0
        %1096 = vadd.xlane.f32.xlu0 %v1095
        %v1097 = vpop.xlane.xlu0 %1096
        %v1098 = vrcp.pop %v1097
        %v1099 = vmul.f32 %v1094, %v1098
        %v1100 = vpack.c.bf16 %v1099, %v1099
        %1101 = vrot.lane.b32.xlu0 %v1038, 40
        %v1102 = vpop.permute.xlu0 %1101
        %v1104 = vsel %vm546, %v1100, 0
        %v1107 = vsel %vm610, %v1102, 0
        %1109 = vmatprep.subr.bf16.mxu0 0
        %1110 = vmatpush1.bf16.msra.mxu0 0
        %1111 = vmatprep.subr.bf16.mxu0 0
        %1112 = vmatpush1.bf16.msra.mxu0 0
        %1113 = vmatprep.subr.bf16.mxu0 0
        %1114 = vmatpush1.bf16.msra.mxu0 0
        %1115 = vmatprep.subr.bf16.mxu0 0
        %1116 = vmatpush1.bf16.msra.mxu0 0
        %1117 = vmatprep.subr.bf16.mxu0 0
        %1118 = vmatpush1.bf16.msra.mxu0 0
        %1119 = vmatprep.subr.bf16.mxu0 0
        %1120 = vmatpush1.bf16.msra.mxu0 0
        %1121 = vmatprep.subr.bf16.mxu0 0
        %1122 = vmatpush1.bf16.msra.mxu0 0
        %1123 = vmatprep.subr.bf16.mxu0 0
        %1124 = vmatpush1.bf16.msra.mxu0 %v1107
        %1125 = vmatprep.subr.bf16.mxu0 0
        %1126 = vmatpush2.bf16.msra.mxu0 0
        %1127 = vmatprep.subr.bf16.mxu0 0
        %1128 = vmatpush2.bf16.msra.mxu0 0
        %1129 = vmatprep.subr.bf16.mxu0 0
        %1130 = vmatpush2.bf16.msra.mxu0 0
        %1131 = vmatprep.subr.bf16.mxu0 0
        %1132 = vmatpush2.bf16.msra.mxu0 0
        %1133 = vmatprep.subr.bf16.mxu0 0
        %1134 = vmatpush2.bf16.msra.mxu0 0
        %1135 = vmatprep.subr.bf16.mxu0 0
        %1136 = vmatpush2.bf16.msra.mxu0 0
        %1137 = vmatprep.subr.bf16.mxu0 0
        %1138 = vmatpush2.bf16.msra.mxu0 0
        %1139 = vmatprep.subr.bf16.mxu0 0
        %1140 = vmatpush2.bf16.msra.mxu0 0
        %1141 = vmatprep.mubr.bf16.mxu0 0
        %1142 = vmatmul.mubr.bf16.gmra.mxu0 %v1104
        %v1143 = vpop.f32.mrf.mxu0
        %v1144 = vadd.f32 0.0, %v1143
        %v1145 = vpop.f32.mrf.mxu0
        %v1146 = vpop.f32.mrf.mxu0
        %v1147 = vpop.f32.mrf.mxu0
        %1148 = vdwg.mxu0
        %v1149 = vld [vmem:[#allocation3] sm:$0xff]
        %v1150 = vpack.c.bf16 %v1144, %v1144
        %v1151 = vld [vmem:[%s5 + $0xc] sm:$0xf]
        %v1153 = vsel %vm546, %v1150, 0
        %v1156 = vsel %vm610, %v1151, 0
        %1158 = vmatprep.subr.bf16.mxu0 0
        %1159 = vmatpush1.bf16.msra.mxu0 0
        %1160 = vmatprep.subr.bf16.mxu0 0
        %1161 = vmatpush1.bf16.msra.mxu0 0
        %1162 = vmatprep.subr.bf16.mxu0 0
        %1163 = vmatpush1.bf16.msra.mxu0 0
        %1164 = vmatprep.subr.bf16.mxu0 0
        %1165 = vmatpush1.bf16.msra.mxu0 0
        %1166 = vmatprep.subr.bf16.mxu0 0
        %1167 = vmatpush1.bf16.msra.mxu0 0
        %1168 = vmatprep.subr.bf16.mxu0 0
        %1169 = vmatpush1.bf16.msra.mxu0 0
        %1170 = vmatprep.subr.bf16.mxu0 0
        %1171 = vmatpush1.bf16.msra.mxu0 0
        %1172 = vmatprep.subr.bf16.mxu0 0
        %1173 = vmatpush1.bf16.msra.mxu0 %v1156
        %1174 = vmatprep.subr.bf16.mxu0 0
        %1175 = vmatpush2.bf16.msra.mxu0 0
        %1176 = vmatprep.subr.bf16.mxu0 0
        %1177 = vmatpush2.bf16.msra.mxu0 0
        %1178 = vmatprep.subr.bf16.mxu0 0
        %1179 = vmatpush2.bf16.msra.mxu0 0
        %1180 = vmatprep.subr.bf16.mxu0 0
        %1181 = vmatpush2.bf16.msra.mxu0 0
        %1182 = vmatprep.subr.bf16.mxu0 0
        %1183 = vmatpush2.bf16.msra.mxu0 0
        %1184 = vmatprep.subr.bf16.mxu0 0
        %1185 = vmatpush2.bf16.msra.mxu0 0
        %1186 = vmatprep.subr.bf16.mxu0 0
        %1187 = vmatpush2.bf16.msra.mxu0 0
        %1188 = vmatprep.subr.bf16.mxu0 0
        %1189 = vmatpush2.bf16.msra.mxu0 0
        %1190 = vmatprep.mubr.bf16.mxu0 0
        %1191 = vmatmul.mubr.bf16.gmra.mxu0 %v1153
        %v1192 = vpop.f32.mrf.mxu0
        %v1193 = vadd.f32 0.0, %v1192
        %v1194 = vpop.f32.mrf.mxu0
        %v1195 = vpop.f32.mrf.mxu0
        %v1196 = vpop.f32.mrf.mxu0
        %1197 = vdwg.mxu0
        %v1198 = vadd.f32 %v1149, %v1193
        %1199 = vst.msk [vmem:[#allocation3] sm:$0xff] %vm438, %v1198
        %v1200 = vld [vmem:[#allocation3] sm:$0xff]
        %v1201 = vadd.f32 %v437, %v1200
        %v1202 = vld [vmem:[%s6] sm:$0x1]
        %v1204 = vlaneseq
        %v1205 = vshrl.u32 %v1204, 7
        %v1206 = vsub.s32 0, %v1205
        %v1207 = vrot.slane %v1202, %v1206
        %v1209 = vadd.f32 %v1201, %v1207
        %v1210 = vsel %vm438, %v1209, 0.0
        %1211 = vadd.xlane.f32.xlu0 %v1210
        %v1212 = vpop.xlane.xlu0 %1211
        %v1213 = vmul.f32 %v1212, %v442
        %v1214 = vsub.f32 %v1209, %v1213
        %v1215 = vmul.f32 %v1214, %v1214
        %v1216 = vsel %vm438, %v1215, 0.0
        %1217 = vadd.xlane.f32.xlu0 %v1216
        %v1218 = vpop.xlane.xlu0 %1217
        %v1219 = vmul.f32 %v1218, %v442
        %v1220 = vadd.f32 %v1219, 1e-05
        %v1221 = vrsqrt.pop %v1220
        %v1222 = vmul.f32 %v1214, %v1221
        %v1223 = vld [vmem:[%s7] sm:$0x1]
        %v1225 = vlaneseq
        %v1226 = vshrl.u32 %v1225, 7
        %v1227 = vsub.s32 0, %v1226
        %v1228 = vrot.slane %v1223, %v1227
        %v1230 = vmul.f32 %v1222, %v1228
        %v1231 = vld [vmem:[%s8] sm:$0x1]
        %v1233 = vlaneseq
        %v1234 = vshrl.u32 %v1233, 7
        %v1235 = vsub.s32 0, %v1234
        %v1236 = vrot.slane %v1231, %v1235
        %v1238 = vadd.f32 %v1230, %v1236
        %v1239 = vpack.c.bf16 %v1238, %v1238
        %v1240 = vld [vmem:[%s9] sm:$0xf]
        %v1241 = vld [vmem:[%s9 + $0x4] sm:$0xf]
        %v1242 = vld [vmem:[%s9 + $0x8] sm:$0xf]
        %v1243 = vld [vmem:[%s9 + $0xc] sm:$0xf]
        %v1244 = vld [vmem:[%s10] sm:$0x1]
        %v1246 = vlaneseq
        %v1247 = vshrl.u32 %v1246, 7
        %v1248 = vsub.s32 0, %v1247
        %v1249 = vrot.slane %v1244, %v1248
        %v1255 = vunpack.c.l.b16 %v1240
        %v1256 = vunpack.c.l.b16 %v1241
        %v1257 = vunpack.c.l.b16 %v1242
        %v1258 = vunpack.c.l.b16 %v1243
        %v1259 = vpack.c.b16 %v1256, %v1255
        %v1260 = vpack.c.b16 %v1258, %v1257
        %v1264 = vsel %vm438, %v1239, 0
        %1266 = vmatprep.subr.bf16.mxu0 0
        %1267 = vmatpush1.bf16.msra.mxu0 0
        %1268 = vmatprep.subr.bf16.mxu0 0
        %1269 = vmatpush1.bf16.msra.mxu0 0
        %1270 = vmatprep.subr.bf16.mxu0 0
        %1271 = vmatpush1.bf16.msra.mxu0 0
        %1272 = vmatprep.subr.bf16.mxu0 0
        %1273 = vmatpush1.bf16.msra.mxu0 0
        %1274 = vmatprep.subr.bf16.mxu0 0
        %1275 = vmatpush1.bf16.msra.mxu0 0
        %1276 = vmatprep.subr.bf16.mxu0 0
        %1277 = vmatpush1.bf16.msra.mxu0 0
        %1278 = vmatprep.subr.bf16.mxu0 0
        %1279 = vmatpush1.bf16.msra.mxu0 %v1260
        %1280 = vmatprep.subr.bf16.mxu0 0
        %1281 = vmatpush1.bf16.msra.mxu0 %v1259
        %1282 = vmatprep.subr.bf16.mxu0 0
        %1283 = vmatpush2.bf16.msra.mxu0 0
        %1284 = vmatprep.subr.bf16.mxu0 0
        %1285 = vmatpush2.bf16.msra.mxu0 0
        %1286 = vmatprep.subr.bf16.mxu0 0
        %1287 = vmatpush2.bf16.msra.mxu0 0
        %1288 = vmatprep.subr.bf16.mxu0 0
        %1289 = vmatpush2.bf16.msra.mxu0 0
        %1290 = vmatprep.subr.bf16.mxu0 0
        %1291 = vmatpush2.bf16.msra.mxu0 0
        %1292 = vmatprep.subr.bf16.mxu0 0
        %1293 = vmatpush2.bf16.msra.mxu0 0
        %1294 = vmatprep.subr.bf16.mxu0 0
        %1295 = vmatpush2.bf16.msra.mxu0 0
        %1296 = vmatprep.subr.bf16.mxu0 0
        %1297 = vmatpush2.bf16.msra.mxu0 0
        %1298 = vmatprep.mubr.bf16.mxu0 0
        %1299 = vmatmul.mubr.bf16.gmra.mxu0 %v1264
        %v1300 = vpop.f32.mrf.mxu0
        %v1301 = vadd.f32 %v1249, %v1300
        %v1302 = vpop.f32.mrf.mxu0
        %v1303 = vpop.f32.mrf.mxu0
        %v1304 = vpop.f32.mrf.mxu0
        %1305 = vdwg.mxu0
        %v1306 = vmul.f32 %v1301, %v1301
        %v1307 = vmul.f32 %v1301, 0.7978846
        %v1308 = vmul.f32 %v1306, 0.044715
        %v1309 = vadd.f32 %v1308, 1.0
        %v1310 = vmul.f32 %v1307, %v1309
        %v1311 = vtanh.pop %v1310
        %v1312 = vmul.f32 %v1311, 0.5
        %v1313 = vadd.f32 %v1312, 0.5
        %v1314 = vmul.f32 %v1301, %v1313
        %v1315 = vpack.c.bf16 %v1314, %v1314
        %v1316 = vld [vmem:[%s11] sm:$0xf]
        %v1317 = vld [vmem:[%s11 + $0x4] sm:$0xf]
        %v1318 = vld [vmem:[%s11 + $0x8] sm:$0xf]
        %v1319 = vld [vmem:[%s11 + $0xc] sm:$0xf]
        %v1320 = vld [vmem:[%s11 + $0x10] sm:$0xf]
        %v1321 = vld [vmem:[%s11 + $0x14] sm:$0xf]
        %v1322 = vld [vmem:[%s11 + $0x18] sm:$0xf]
        %v1323 = vld [vmem:[%s11 + $0x1c] sm:$0xf]
        %v1324 = vld [vmem:[%s11 + $0x20] sm:$0xf]
        %v1325 = vld [vmem:[%s11 + $0x24] sm:$0xf]
        %v1326 = vld [vmem:[%s11 + $0x28] sm:$0xf]
        %v1327 = vld [vmem:[%s11 + $0x2c] sm:$0xf]
        %v1328 = vld [vmem:[%s11 + $0x30] sm:$0xf]
        %v1329 = vld [vmem:[%s11 + $0x34] sm:$0xf]
        %v1330 = vld [vmem:[%s11 + $0x38] sm:$0xf]
        %v1331 = vld [vmem:[%s11 + $0x3c] sm:$0xf]
        %v1332 = vld [vmem:[%s12] sm:$0x1]
        %v1334 = vlaneseq
        %v1335 = vshrl.u32 %v1334, 7
        %v1336 = vsub.s32 0, %v1335
        %v1337 = vrot.slane %v1332, %v1336
        %v1355 = vunpack.c.l.b16 %v1316
        %v1356 = vunpack.c.l.b16 %v1317
        %v1357 = vunpack.c.l.b16 %v1318
        %v1358 = vunpack.c.l.b16 %v1319
        %v1359 = vunpack.c.l.b16 %v1320
        %v1360 = vunpack.c.l.b16 %v1321
        %v1361 = vunpack.c.l.b16 %v1322
        %v1362 = vunpack.c.l.b16 %v1323
        %v1363 = vunpack.c.l.b16 %v1324
        %v1364 = vunpack.c.l.b16 %v1325
        %v1365 = vunpack.c.l.b16 %v1326
        %v1366 = vunpack.c.l.b16 %v1327
        %v1367 = vunpack.c.l.b16 %v1328
        %v1368 = vunpack.c.l.b16 %v1329
        %v1369 = vunpack.c.l.b16 %v1330
        %v1370 = vunpack.c.l.b16 %v1331
        %v1371 = vpack.c.b16 %v1356, %v1355
        %v1372 = vpack.c.b16 %v1358, %v1357
        %v1373 = vpack.c.b16 %v1360, %v1359
        %v1374 = vpack.c.b16 %v1362, %v1361
        %v1375 = vpack.c.b16 %v1364, %v1363
        %v1376 = vpack.c.b16 %v1366, %v1365
        %v1377 = vpack.c.b16 %v1368, %v1367
        %v1378 = vpack.c.b16 %v1370, %v1369
        %1387 = vmatprep.subr.bf16.mxu0 0
        %1388 = vmatpush1.bf16.msra.mxu0 %v1378
        %1389 = vmatprep.subr.bf16.mxu0 0
        %1390 = vmatpush1.bf16.msra.mxu0 %v1377
        %1391 = vmatprep.subr.bf16.mxu0 0
        %1392 = vmatpush1.bf16.msra.mxu0 %v1376
        %1393 = vmatprep.subr.bf16.mxu0 0
        %1394 = vmatpush1.bf16.msra.mxu0 %v1375
        %1395 = vmatprep.subr.bf16.mxu0 0
        %1396 = vmatpush1.bf16.msra.mxu0 %v1374
        %1397 = vmatprep.subr.bf16.mxu0 0
        %1398 = vmatpush1.bf16.msra.mxu0 %v1373
        %1399 = vmatprep.subr.bf16.mxu0 0
        %1400 = vmatpush1.bf16.msra.mxu0 %v1372
        %1401 = vmatprep.subr.bf16.mxu0 0
        %1402 = vmatpush1.bf16.msra.mxu0 %v1371
        %1403 = vmatprep.subr.bf16.mxu0 0
        %1404 = vmatpush2.bf16.msra.mxu0 0
        %1405 = vmatprep.subr.bf16.mxu0 0
        %1406 = vmatpush2.bf16.msra.mxu0 0
        %1407 = vmatprep.subr.bf16.mxu0 0
        %1408 = vmatpush2.bf16.msra.mxu0 0
        %1409 = vmatprep.subr.bf16.mxu0 0
        %1410 = vmatpush2.bf16.msra.mxu0 0
        %1411 = vmatprep.subr.bf16.mxu0 0
        %1412 = vmatpush2.bf16.msra.mxu0 0
        %1413 = vmatprep.subr.bf16.mxu0 0
        %1414 = vmatpush2.bf16.msra.mxu0 0
        %1415 = vmatprep.subr.bf16.mxu0 0
        %1416 = vmatpush2.bf16.msra.mxu0 0
        %1417 = vmatprep.subr.bf16.mxu0 0
        %1418 = vmatpush2.bf16.msra.mxu0 0
        %1419 = vmatprep.mubr.bf16.mxu0 0
        %1420 = vmatmul.mubr.bf16.gmra.mxu0 %v1315
        %v1421 = vpop.f32.mrf.mxu0
        %v1422 = vadd.f32 %v1337, %v1421
        %v1423 = vpop.f32.mrf.mxu0
        %v1424 = vpop.f32.mrf.mxu0
        %v1425 = vpop.f32.mrf.mxu0
        %1426 = vdwg.mxu0
        %v1427 = vadd.f32 %v1209, %v1422
        %1428 = vst.msk [vmem:[%s431] sm:$0xff] %vm438, %v1427
        %s1429 = sand.u32 %s313, 1
        %s1430 = scalar_lea.sflag [#allocation5], %s1429
        %s1431 = sand.u32 %s313, 1
        %s1432 = smul.addr %s1431, 8
        %s1433 = scalar_lea.vmem [#allocation4], %s1432
        // Predicated region
        $region73: #{tpu_custom_call.1} parent=71 // pred_check
          %p1434 = pneg %p323
        $region74: #{tpu_custom_call.1} parent=71 // pred_check_branch
          %1436 = sbr.rel (%p1434) target = $region76
        $region75: #{tpu_custom_call.1} parent=71 // pred_region
          %s1438 = ssub.s32 128, 128
          %1439 = vsyncadd %s1430, %s1438
          %s1440 = smul.addr %s27, 128
          %s1441 = scalar_lea.hbm %s13, %s1440
          %s1443 = sshll.u32 %s1433, 4
          %s1444 = int_to_ptr.vmem [resolvable:$true] %s1443
          %1446 = dma.vmem_to_hbm [thread:$0]  %s1444, 128, %s1441, %s1430
        $region76: #{tpu_custom_call.1} parent=71 // pred_fallthru
          _
      $region72: #{tpu_custom_call.1} parent=5 // pred_fallthru
        _
      %p1447 = scmp.le.s32.totalorder 2, %s22
      // Predicated region
      $region77: #{tpu_custom_call.1} parent=5 // pred_check
        %p1448 = pneg %p1447
      $region78: #{tpu_custom_call.1} parent=5 // pred_check_branch
        %1450 = sbr.rel (%p1448) target = $region80
      $region79: #{tpu_custom_call.1} parent=5 // pred_region
        %s1451 = ssub.s32 %s22, 2
        // Predicated region
        $region81: #{tpu_custom_call.1} parent=79 // pred_check
          %p1452 = pneg %p329
        $region82: #{tpu_custom_call.1} parent=79 // pred_check_branch
          %1454 = sbr.rel (%p1452) target = $region84
        $region83: #{tpu_custom_call.1} parent=79 // pred_region
          %s1455 = sand.u32 %s314, 1
          %s1456 = scalar_lea.sflag [#allocation5], %s1455
          %s1457 = sand.u32 %s314, 1
          %s1458 = smul.addr %s1457, 8
          %s1459 = scalar_lea.vmem [#allocation4], %s1458
          %1460 = dma.done %s1456, 128
        $region84: #{tpu_custom_call.1} parent=79 // pred_fallthru
          _
      $region80: #{tpu_custom_call.1} parent=5 // pred_fallthru
        _
    $region6: #{tpu_custom_call.1} parent=1 // loop_footer
      %s26 = sadd.s32 1, %s22
    $region7: #{tpu_custom_call.1} parent=1 // loop_footer_branch
      %21 = sbr.rel target = $region3
    $region8: #{tpu_custom_call.1} parent=1 // loop_exit
      _
    %1461 = vsyncpa [#allocation5], 1
    %s1462 = scalar_lea.sflag [#allocation5], 1
    %1463 = vsyncpa %s1462, 1

</llo_original>
